<compile_context>
chip_gen: v6e
topology: v6e:2x2x1
jax: 0.10.0
libtpu: 0.0.40
codegen_flags: <defaults>
</compile_context>

<pallas_src>
import functools
import math

import jax
import jax.numpy as jnp
from jax import lax
from jax.experimental import pallas as pl
from jax.experimental.pallas import tpu as pltpu


# ---------------------------------------------------------------------------
# Fused kernel (one grid step == one batch element):
#   in-proj + per-head attention + out-proj, all in VMEM / vregs.
# ---------------------------------------------------------------------------
def _cross_attention_kernel(xq_ref, xk_ref, xv_ref,
                            w_in_ref, b_in_ref,
                            wo_ref, bo_ref,
                            o_ref,
                            *, H, Dh, E, scale):
    f32 = jnp.float32
    # a[m,k] . b[n,k] -> [m,n]: contract last axes directly (no operand .T).
    dn_nt = (((1,), (1,)), ((), ()))
    # a[m,k] . b[k,n] -> [m,n]
    dn_nn = (((1,), (0,)), ((), ()))

    # MXU operand dtype follows the inputs (bf16 stays bf16; f32 casts are no-ops).
    mxu_dtype = xq_ref.dtype

    # ---- static, tile-aligned slices of the consolidated weight/bias refs ----
    w_in = w_in_ref[...]                       # (3E, E)
    wq = w_in[0 * E:1 * E, :]
    wk = w_in[1 * E:2 * E, :]
    wv = w_in[2 * E:3 * E, :]
    b_in = b_in_ref[...].astype(f32)           # (3, E)
    bq = b_in[0:1, :]
    bk = b_in[1:2, :]
    bv = b_in[2:3, :]

    # ---- shared in-projections: three well-shaped MXU matmuls ----------------
    q = lax.dot_general(xq_ref[...], wq, dn_nt, preferred_element_type=f32) + bq
    k = lax.dot_general(xk_ref[...], wk, dn_nt, preferred_element_type=f32) + bk
    v = lax.dot_general(xv_ref[...], wv, dn_nt, preferred_element_type=f32) + bv
    q = q * scale                              # apply 1/sqrt(Dh) once, up front

    # ---- per-head attention (fully unrolled; everything lives in vregs) ------
    heads = []
    for h in range(H):
        lo = h * Dh
        qh = q[:, lo:lo + Dh].astype(mxu_dtype)    # (Sq, Dh)
        kh = k[:, lo:lo + Dh].astype(mxu_dtype)    # (Skv, Dh)
        vh = v[:, lo:lo + Dh].astype(mxu_dtype)    # (Skv, Dh)

        # scores on the MXU, contracting the head dim directly
        s = lax.dot_general(qh, kh, dn_nt, preferred_element_type=f32)  # (Sq, Skv)

        # numerically-stable softmax with deferred normalization
        m = jnp.max(s, axis=-1, keepdims=True)
        p = jnp.exp(s - m)
        denom = jnp.sum(p, axis=-1, keepdims=True)

        oh = lax.dot_general(p.astype(mxu_dtype), vh, dn_nn,
                             preferred_element_type=f32)                # (Sq, Dh)
        oh = oh * pl.reciprocal(denom, approx=True)                     # EUP vrcp
        heads.append(oh)

    # ---- one out-projection matmul + one lane-dense store --------------------
    o_slab = jnp.concatenate(heads, axis=-1)        # (Sq, E): heads side-by-side
    out = lax.dot_general(o_slab.astype(mxu_dtype),
                          wo_ref[...].astype(mxu_dtype), dn_nt,
                          preferred_element_type=f32)
    out = out + bo_ref[...].astype(f32)
    o_ref[...] = out.astype(o_ref.dtype)


# ---------------------------------------------------------------------------
# CrossAttention forward
# ---------------------------------------------------------------------------
@functools.partial(jax.jit, static_argnames=("num_heads",))
def cross_attention_forward(query, key, value, params, num_heads):
    B, Sq, E = query.shape
    Skv = key.shape[1]
    H = num_heads
    assert E % H == 0, "embed_dim must be divisible by num_heads"
    Dh = E // H
    scale = 1.0 / math.sqrt(Dh)

    # No host-side dtype upcasts, no host-side weight slicing: pass consolidated
    # refs and let the kernel take static sublane slices.
    w_in = params["in_proj_weight"]                    # (3E, E)
    b_in = params["in_proj_bias"].reshape(3, E)        # (3, E)  free reshape
    wo = params["out_proj_weight"]                     # (E, E)
    bo = params["out_proj_bias"].reshape(1, E)         # (1, E)

    # Row-major flatten only (free, contiguous) -- no head transposes on host.
    xq = query.reshape(B * Sq, E)
    xk = key.reshape(B * Skv, E)
    xv = value.reshape(B * Skv, E)

    kern = functools.partial(_cross_attention_kernel,
                             H=H, Dh=Dh, E=E, scale=scale)

    out = pl.pallas_call(
        kern,
        out_shape=jax.ShapeDtypeStruct((B * Sq, E), query.dtype),
        grid=(B,),
        in_specs=[
            pl.BlockSpec((Sq, E), lambda b: (b, 0)),    # xq  (per-batch rows)
            pl.BlockSpec((Skv, E), lambda b: (b, 0)),   # xk
            pl.BlockSpec((Skv, E), lambda b: (b, 0)),   # xv
            pl.BlockSpec((3 * E, E), lambda b: (0, 0)),  # in_proj_weight (resident)
            pl.BlockSpec((3, E), lambda b: (0, 0)),      # in_proj_bias   (resident)
            pl.BlockSpec((E, E), lambda b: (0, 0)),      # out_proj_weight
            pl.BlockSpec((1, E), lambda b: (0, 0)),      # out_proj_bias
        ],
        out_specs=pl.BlockSpec((Sq, E), lambda b: (b, 0)),
        compiler_params=pltpu.CompilerParams(
            dimension_semantics=("parallel",)),          # shard batches over TCs (v7x)
    )(xq, xk, xv, w_in, b_in, wo, bo)

    return out.reshape(B, Sq, E)


# ---------------------------------------------------------------------------
# Pure-JAX reference (same math) for correctness check
# ---------------------------------------------------------------------------
def cross_attention_reference(query, key, value, params, num_heads):
    B, Sq, E = query.shape
    Skv = key.shape[1]
    Dh = E // num_heads
    scale = 1.0 / math.sqrt(Dh)
    w_in, b_in = params["in_proj_weight"], params["in_proj_bias"]
    wq, wk, wv = w_in[:E], w_in[E:2 * E], w_in[2 * E:]
    bq, bk, bv = b_in[:E], b_in[E:2 * E], b_in[2 * E:]
    q = query @ wq.T + bq
    k = key @ wk.T + bk
    v = value @ wv.T + bv
    qh = q.reshape(B, Sq, num_heads, Dh).transpose(0, 2, 1, 3) * scale
    kh = k.reshape(B, Skv, num_heads, Dh).transpose(0, 2, 1, 3)
    vh = v.reshape(B, Skv, num_heads, Dh).transpose(0, 2, 1, 3)
    s = jnp.einsum("bhqd,bhkd->bhqk", qh, kh)
    p = jax.nn.softmax(s, axis=-1)
    oh = jnp.einsum("bhqk,bhkd->bhqd", p, vh)
    o = oh.transpose(0, 2, 1, 3).reshape(B, Sq, E)
    return o @ params["out_proj_weight"].T + params["out_proj_bias"]


# ---------------------------------------------------------------------------
def init_params(key, embed_dim):
    # Deterministic synthetic init (shapes match nn.MultiheadAttention params).
    k1, k2 = jax.random.split(key)
    bound = 1.0 / math.sqrt(embed_dim)
    return {
        "in_proj_weight": jax.random.uniform(
            k1, (3 * embed_dim, embed_dim), jnp.float32, -bound, bound),
        "in_proj_bias": jnp.zeros((3 * embed_dim,), jnp.float32),
        "out_proj_weight": jax.random.uniform(
            k2, (embed_dim, embed_dim), jnp.float32, -bound, bound),
        "out_proj_bias": jnp.zeros((embed_dim,), jnp.float32),
    }


if __name__ == "__main__":
    B, Sq, Skv, E, H = 2, 8, 16, 32, 4

    root = jax.random.PRNGKey(0)
    kq, kk, kv, kp = jax.random.split(root, 4)
    query = jax.random.normal(kq, (B, Sq, E), jnp.float32)
    key_in = jax.random.normal(kk, (B, Skv, E), jnp.float32)
    value = jax.random.normal(kv, (B, Skv, E), jnp.float32)
    params = init_params(kp, E)

    out = cross_attention_forward(query, key_in, value, params, H)
    out = jax.block_until_ready(out)

    ref = cross_attention_reference(query, key_in, value, params, H)
    assert out.shape == (B, Sq, E)
    # Tolerance relaxed slightly vs 1e-5: approx-reciprocal softmax normalization.
    assert jnp.allclose(out, ref, rtol=1e-2, atol=1e-2), "mismatch vs reference"

    print("KERNEL_OK")
</pallas_src>

<mosaic_0001>
module attributes {stable_mosaic.version = 11 : i64} {
  func.func @_cross_attention_kernel(%arg0: i32, %arg1: memref<8x32xf32, #tpu.memory_space<vmem>>, %arg2: memref<16x32xf32, #tpu.memory_space<vmem>>, %arg3: memref<16x32xf32, #tpu.memory_space<vmem>>, %arg4: memref<96x32xf32, #tpu.memory_space<vmem>>, %arg5: memref<3x32xf32, #tpu.memory_space<vmem>>, %arg6: memref<32x32xf32, #tpu.memory_space<vmem>>, %arg7: memref<1x32xf32, #tpu.memory_space<vmem>>, %arg8: memref<8x32xf32, #tpu.memory_space<vmem>>) attributes {dimension_semantics = [#tpu.dimension_semantics<parallel>], iteration_bounds = array<i64: 2>, scalar_prefetch = 0 : i64, scratch_operands = 0 : i64, tpu.core_type = #tpu.core_type<tc>, window_params = [{transform_indices = @transform_0, window_bounds = array<i64: 8, 32>}, {transform_indices = @transform_1, window_bounds = array<i64: 16, 32>}, {transform_indices = @transform_2, window_bounds = array<i64: 16, 32>}, {pipeline_mode = #tpu.pipeline_mode<synchronous>, transform_indices = @transform_3, window_bounds = array<i64: 96, 32>}, {pipeline_mode = #tpu.pipeline_mode<synchronous>, transform_indices = @transform_4, window_bounds = array<i64: 3, 32>}, {pipeline_mode = #tpu.pipeline_mode<synchronous>, transform_indices = @transform_5, window_bounds = array<i64: 32, 32>}, {pipeline_mode = #tpu.pipeline_mode<synchronous>, transform_indices = @transform_6, window_bounds = array<i64: 1, 32>}, {transform_indices = @transform_7, window_bounds = array<i64: 8, 32>}]} {
    %c0 = arith.constant 0 : index
    %c0_0 = arith.constant 0 : index
    %0 = vector.load %arg4[%c0, %c0_0] : memref<96x32xf32, #tpu.memory_space<vmem>>, vector<96x32xf32>
    %1 = vector.extract_strided_slice %0 {offsets = [0, 0], sizes = [32, 32], strides = [1, 1]} : vector<96x32xf32> to vector<32x32xf32>
    %2 = vector.extract_strided_slice %0 {offsets = [32, 0], sizes = [32, 32], strides = [1, 1]} : vector<96x32xf32> to vector<32x32xf32>
    %3 = vector.extract_strided_slice %0 {offsets = [64, 0], sizes = [32, 32], strides = [1, 1]} : vector<96x32xf32> to vector<32x32xf32>
    %c0_1 = arith.constant 0 : index
    %c0_2 = arith.constant 0 : index
    %4 = vector.load %arg5[%c0_1, %c0_2] : memref<3x32xf32, #tpu.memory_space<vmem>>, vector<3x32xf32>
    %5 = vector.extract_strided_slice %4 {offsets = [0, 0], sizes = [1, 32], strides = [1, 1]} : vector<3x32xf32> to vector<1x32xf32>
    %6 = vector.extract_strided_slice %4 {offsets = [1, 0], sizes = [1, 32], strides = [1, 1]} : vector<3x32xf32> to vector<1x32xf32>
    %7 = vector.extract_strided_slice %4 {offsets = [2, 0], sizes = [1, 32], strides = [1, 1]} : vector<3x32xf32> to vector<1x32xf32>
    %c0_3 = arith.constant 0 : index
    %c0_4 = arith.constant 0 : index
    %8 = vector.load %arg1[%c0_3, %c0_4] : memref<8x32xf32, #tpu.memory_space<vmem>>, vector<8x32xf32>
    %cst = arith.constant dense<0.000000e+00> : vector<8x32xf32>
    %9 = tpu.matmul %8, %1, %cst {dimension_numbers = #tpu.dot_dimension_numbers<[1], [1], [0], [0], [0, 0, 1, 0], [], []>} : vector<8x32xf32>, vector<32x32xf32>, vector<8x32xf32> -> vector<8x32xf32>
    %10 = vector.broadcast %5 : vector<1x32xf32> to vector<8x32xf32>
    %11 = arith.addf %9, %10 : vector<8x32xf32>
    %c0_5 = arith.constant 0 : index
    %c0_6 = arith.constant 0 : index
    %12 = vector.load %arg2[%c0_5, %c0_6] : memref<16x32xf32, #tpu.memory_space<vmem>>, vector<16x32xf32>
    %cst_7 = arith.constant dense<0.000000e+00> : vector<16x32xf32>
    %13 = tpu.matmul %12, %2, %cst_7 {dimension_numbers = #tpu.dot_dimension_numbers<[1], [1], [0], [0], [0, 0, 1, 0], [], []>} : vector<16x32xf32>, vector<32x32xf32>, vector<16x32xf32> -> vector<16x32xf32>
    %14 = vector.broadcast %6 : vector<1x32xf32> to vector<16x32xf32>
    %15 = arith.addf %13, %14 : vector<16x32xf32>
    %c0_8 = arith.constant 0 : index
    %c0_9 = arith.constant 0 : index
    %16 = vector.load %arg3[%c0_8, %c0_9] : memref<16x32xf32, #tpu.memory_space<vmem>>, vector<16x32xf32>
    %cst_10 = arith.constant dense<0.000000e+00> : vector<16x32xf32>
    %17 = tpu.matmul %16, %3, %cst_10 {dimension_numbers = #tpu.dot_dimension_numbers<[1], [1], [0], [0], [0, 0, 1, 0], [], []>} : vector<16x32xf32>, vector<32x32xf32>, vector<16x32xf32> -> vector<16x32xf32>
    %18 = vector.broadcast %7 : vector<1x32xf32> to vector<16x32xf32>
    %19 = arith.addf %17, %18 : vector<16x32xf32>
    %cst_11 = arith.constant 0.353553385 : f32
    %20 = vector.broadcast %cst_11 : f32 to vector<8x32xf32>
    %21 = arith.mulf %11, %20 : vector<8x32xf32>
    %22 = vector.extract_strided_slice %21 {offsets = [0, 0], sizes = [8, 8], strides = [1, 1]} : vector<8x32xf32> to vector<8x8xf32>
    %23 = vector.extract_strided_slice %15 {offsets = [0, 0], sizes = [16, 8], strides = [1, 1]} : vector<16x32xf32> to vector<16x8xf32>
    %24 = vector.extract_strided_slice %19 {offsets = [0, 0], sizes = [16, 8], strides = [1, 1]} : vector<16x32xf32> to vector<16x8xf32>
    %cst_12 = arith.constant dense<0.000000e+00> : vector<8x16xf32>
    %25 = tpu.matmul %22, %23, %cst_12 {dimension_numbers = #tpu.dot_dimension_numbers<[1], [1], [0], [0], [0, 0, 1, 0], [], []>} : vector<8x8xf32>, vector<16x8xf32>, vector<8x16xf32> -> vector<8x16xf32>
    %cst_13 = arith.constant dense<0xFF800000> : vector<8xf32>
    %26 = vector.multi_reduction <maximumf>, %25, %cst_13 [1] : vector<8x16xf32> to vector<8xf32>
    %27 = vector.shape_cast %26 : vector<8xf32> to vector<8x1xf32>
    %28 = vector.broadcast %27 : vector<8x1xf32> to vector<8x16xf32>
    %29 = arith.subf %25, %28 : vector<8x16xf32>
    %30 = math.exp %29 : vector<8x16xf32>
    %cst_14 = arith.constant dense<0.000000e+00> : vector<8xf32>
    %31 = vector.multi_reduction <add>, %30, %cst_14 [1] : vector<8x16xf32> to vector<8xf32>
    %32 = vector.shape_cast %31 : vector<8xf32> to vector<8x1xf32>
    %cst_15 = arith.constant dense<0.000000e+00> : vector<8x8xf32>
    %33 = tpu.matmul %30, %24, %cst_15 {dimension_numbers = #tpu.dot_dimension_numbers<[1], [0], [0], [1], [0, 0, 1, 1], [], []>} : vector<8x16xf32>, vector<16x8xf32>, vector<8x8xf32> -> vector<8x8xf32>
    %34 = tpu.reciprocal %32 {approx = true} : vector<8x1xf32> -> vector<8x1xf32>
    %35 = vector.broadcast %34 : vector<8x1xf32> to vector<8x8xf32>
    %36 = arith.mulf %33, %35 : vector<8x8xf32>
    %37 = vector.extract_strided_slice %21 {offsets = [0, 8], sizes = [8, 8], strides = [1, 1]} : vector<8x32xf32> to vector<8x8xf32>
    %38 = vector.extract_strided_slice %15 {offsets = [0, 8], sizes = [16, 8], strides = [1, 1]} : vector<16x32xf32> to vector<16x8xf32>
    %39 = vector.extract_strided_slice %19 {offsets = [0, 8], sizes = [16, 8], strides = [1, 1]} : vector<16x32xf32> to vector<16x8xf32>
    %cst_16 = arith.constant dense<0.000000e+00> : vector<8x16xf32>
    %40 = tpu.matmul %37, %38, %cst_16 {dimension_numbers = #tpu.dot_dimension_numbers<[1], [1], [0], [0], [0, 0, 1, 0], [], []>} : vector<8x8xf32>, vector<16x8xf32>, vector<8x16xf32> -> vector<8x16xf32>
    %cst_17 = arith.constant dense<0xFF800000> : vector<8xf32>
    %41 = vector.multi_reduction <maximumf>, %40, %cst_17 [1] : vector<8x16xf32> to vector<8xf32>
    %42 = vector.shape_cast %41 : vector<8xf32> to vector<8x1xf32>
    %43 = vector.broadcast %42 : vector<8x1xf32> to vector<8x16xf32>
    %44 = arith.subf %40, %43 : vector<8x16xf32>
    %45 = math.exp %44 : vector<8x16xf32>
    %cst_18 = arith.constant dense<0.000000e+00> : vector<8xf32>
    %46 = vector.multi_reduction <add>, %45, %cst_18 [1] : vector<8x16xf32> to vector<8xf32>
    %47 = vector.shape_cast %46 : vector<8xf32> to vector<8x1xf32>
    %cst_19 = arith.constant dense<0.000000e+00> : vector<8x8xf32>
    %48 = tpu.matmul %45, %39, %cst_19 {dimension_numbers = #tpu.dot_dimension_numbers<[1], [0], [0], [1], [0, 0, 1, 1], [], []>} : vector<8x16xf32>, vector<16x8xf32>, vector<8x8xf32> -> vector<8x8xf32>
    %49 = tpu.reciprocal %47 {approx = true} : vector<8x1xf32> -> vector<8x1xf32>
    %50 = vector.broadcast %49 : vector<8x1xf32> to vector<8x8xf32>
    %51 = arith.mulf %48, %50 : vector<8x8xf32>
    %52 = vector.extract_strided_slice %21 {offsets = [0, 16], sizes = [8, 8], strides = [1, 1]} : vector<8x32xf32> to vector<8x8xf32>
    %53 = vector.extract_strided_slice %15 {offsets = [0, 16], sizes = [16, 8], strides = [1, 1]} : vector<16x32xf32> to vector<16x8xf32>
    %54 = vector.extract_strided_slice %19 {offsets = [0, 16], sizes = [16, 8], strides = [1, 1]} : vector<16x32xf32> to vector<16x8xf32>
    %cst_20 = arith.constant dense<0.000000e+00> : vector<8x16xf32>
    %55 = tpu.matmul %52, %53, %cst_20 {dimension_numbers = #tpu.dot_dimension_numbers<[1], [1], [0], [0], [0, 0, 1, 0], [], []>} : vector<8x8xf32>, vector<16x8xf32>, vector<8x16xf32> -> vector<8x16xf32>
    %cst_21 = arith.constant dense<0xFF800000> : vector<8xf32>
    %56 = vector.multi_reduction <maximumf>, %55, %cst_21 [1] : vector<8x16xf32> to vector<8xf32>
    %57 = vector.shape_cast %56 : vector<8xf32> to vector<8x1xf32>
    %58 = vector.broadcast %57 : vector<8x1xf32> to vector<8x16xf32>
    %59 = arith.subf %55, %58 : vector<8x16xf32>
    %60 = math.exp %59 : vector<8x16xf32>
    %cst_22 = arith.constant dense<0.000000e+00> : vector<8xf32>
    %61 = vector.multi_reduction <add>, %60, %cst_22 [1] : vector<8x16xf32> to vector<8xf32>
    %62 = vector.shape_cast %61 : vector<8xf32> to vector<8x1xf32>
    %cst_23 = arith.constant dense<0.000000e+00> : vector<8x8xf32>
    %63 = tpu.matmul %60, %54, %cst_23 {dimension_numbers = #tpu.dot_dimension_numbers<[1], [0], [0], [1], [0, 0, 1, 1], [], []>} : vector<8x16xf32>, vector<16x8xf32>, vector<8x8xf32> -> vector<8x8xf32>
    %64 = tpu.reciprocal %62 {approx = true} : vector<8x1xf32> -> vector<8x1xf32>
    %65 = vector.broadcast %64 : vector<8x1xf32> to vector<8x8xf32>
    %66 = arith.mulf %63, %65 : vector<8x8xf32>
    %67 = vector.extract_strided_slice %21 {offsets = [0, 24], sizes = [8, 8], strides = [1, 1]} : vector<8x32xf32> to vector<8x8xf32>
    %68 = vector.extract_strided_slice %15 {offsets = [0, 24], sizes = [16, 8], strides = [1, 1]} : vector<16x32xf32> to vector<16x8xf32>
    %69 = vector.extract_strided_slice %19 {offsets = [0, 24], sizes = [16, 8], strides = [1, 1]} : vector<16x32xf32> to vector<16x8xf32>
    %cst_24 = arith.constant dense<0.000000e+00> : vector<8x16xf32>
    %70 = tpu.matmul %67, %68, %cst_24 {dimension_numbers = #tpu.dot_dimension_numbers<[1], [1], [0], [0], [0, 0, 1, 0], [], []>} : vector<8x8xf32>, vector<16x8xf32>, vector<8x16xf32> -> vector<8x16xf32>
    %cst_25 = arith.constant dense<0xFF800000> : vector<8xf32>
    %71 = vector.multi_reduction <maximumf>, %70, %cst_25 [1] : vector<8x16xf32> to vector<8xf32>
    %72 = vector.shape_cast %71 : vector<8xf32> to vector<8x1xf32>
    %73 = vector.broadcast %72 : vector<8x1xf32> to vector<8x16xf32>
    %74 = arith.subf %70, %73 : vector<8x16xf32>
    %75 = math.exp %74 : vector<8x16xf32>
    %cst_26 = arith.constant dense<0.000000e+00> : vector<8xf32>
    %76 = vector.multi_reduction <add>, %75, %cst_26 [1] : vector<8x16xf32> to vector<8xf32>
    %77 = vector.shape_cast %76 : vector<8xf32> to vector<8x1xf32>
    %cst_27 = arith.constant dense<0.000000e+00> : vector<8x8xf32>
    %78 = tpu.matmul %75, %69, %cst_27 {dimension_numbers = #tpu.dot_dimension_numbers<[1], [0], [0], [1], [0, 0, 1, 1], [], []>} : vector<8x16xf32>, vector<16x8xf32>, vector<8x8xf32> -> vector<8x8xf32>
    %79 = tpu.reciprocal %77 {approx = true} : vector<8x1xf32> -> vector<8x1xf32>
    %80 = vector.broadcast %79 : vector<8x1xf32> to vector<8x8xf32>
    %81 = arith.mulf %78, %80 : vector<8x8xf32>
    %82 = tpu.concatenate %36, %51, %66, %81 in 1 : vector<8x8xf32>, vector<8x8xf32>, vector<8x8xf32>, vector<8x8xf32> -> vector<8x32xf32>
    %c0_28 = arith.constant 0 : index
    %c0_29 = arith.constant 0 : index
    %83 = vector.load %arg6[%c0_28, %c0_29] : memref<32x32xf32, #tpu.memory_space<vmem>>, vector<32x32xf32>
    %cst_30 = arith.constant dense<0.000000e+00> : vector<8x32xf32>
    %84 = tpu.matmul %82, %83, %cst_30 {dimension_numbers = #tpu.dot_dimension_numbers<[1], [1], [0], [0], [0, 0, 1, 0], [], []>} : vector<8x32xf32>, vector<32x32xf32>, vector<8x32xf32> -> vector<8x32xf32>
    %c0_31 = arith.constant 0 : index
    %c0_32 = arith.constant 0 : index
    %85 = vector.load %arg7[%c0_31, %c0_32] : memref<1x32xf32, #tpu.memory_space<vmem>>, vector<1x32xf32>
    %86 = vector.broadcast %85 : vector<1x32xf32> to vector<8x32xf32>
    %87 = arith.addf %84, %86 : vector<8x32xf32>
    %c0_33 = arith.constant 0 : index
    %c0_34 = arith.constant 0 : index
    %88 = vector.load %arg8[%c0_33, %c0_34] : memref<8x32xf32, #tpu.memory_space<vmem>>, vector<8x32xf32>
    tpu.vector_store %arg8[%c0_33, %c0_34], %87 {strides = array<i32>} : memref<8x32xf32, #tpu.memory_space<vmem>>, vector<8x32xf32>,
    return
  }
  func.func @transform_0(%arg0: i32) -> (i32, i32) {
    %c0_i32 = arith.constant 0 : i32
    %c0_i32_0 = arith.constant 0 : i32
    return %arg0, %c0_i32 : i32, i32
  }
  func.func @transform_1(%arg0: i32) -> (i32, i32) {
    %c0_i32 = arith.constant 0 : i32
    %c0_i32_0 = arith.constant 0 : i32
    return %arg0, %c0_i32 : i32, i32
  }
  func.func @transform_2(%arg0: i32) -> (i32, i32) {
    %c0_i32 = arith.constant 0 : i32
    %c0_i32_0 = arith.constant 0 : i32
    return %arg0, %c0_i32 : i32, i32
  }
  func.func @transform_3(%arg0: i32) -> (i32, i32) {
    %c0_i32 = arith.constant 0 : i32
    %c0_i32_0 = arith.constant 0 : i32
    %c0_i32_1 = arith.constant 0 : i32
    return %c0_i32, %c0_i32_0 : i32, i32
  }
  func.func @transform_4(%arg0: i32) -> (i32, i32) {
    %c0_i32 = arith.constant 0 : i32
    %c0_i32_0 = arith.constant 0 : i32
    %c0_i32_1 = arith.constant 0 : i32
    return %c0_i32, %c0_i32_0 : i32, i32
  }
  func.func @transform_5(%arg0: i32) -> (i32, i32) {
    %c0_i32 = arith.constant 0 : i32
    %c0_i32_0 = arith.constant 0 : i32
    %c0_i32_1 = arith.constant 0 : i32
    return %c0_i32, %c0_i32_0 : i32, i32
  }
  func.func @transform_6(%arg0: i32) -> (i32, i32) {
    %c0_i32 = arith.constant 0 : i32
    %c0_i32_0 = arith.constant 0 : i32
    %c0_i32_1 = arith.constant 0 : i32
    return %c0_i32, %c0_i32_0 : i32, i32
  }
  func.func @transform_7(%arg0: i32) -> (i32, i32) {
    %c0_i32 = arith.constant 0 : i32
    %c0_i32_0 = arith.constant 0 : i32
    return %arg0, %c0_i32 : i32, i32
  }
}

</mosaic_0001>

<llo_original>
// kernel: cross_attention_forward.1
$region0: #{cross_attention_forward.1}
  #allocation0 [shape = 'u32[]', space=smem, size = 0x4, offset = 0x4, fixed_abs, tag = 'smem constant byte address 0x4 - core index']
  #allocation1 [shape = 'u32[144,128]{1,0:T(1,128)}', space=vmem, size = 0x12000, scoped, tag = 'internal scratch']
  %s0 = inlined_call_operand.vmem [shape: f32[16,32], index: 0, kind: input, shape index: {}]
  %s1 = inlined_call_operand.vmem [shape: f32[32,32], index: 1, kind: input, shape index: {}]
  %s2 = inlined_call_operand.vmem [shape: f32[32,32], index: 2, kind: input, shape index: {}]
  %s3 = inlined_call_operand.vmem [shape: f32[96,32], index: 3, kind: input, shape index: {}]
  %s4 = inlined_call_operand.vmem [shape: f32[3,32], index: 4, kind: input, shape index: {}]
  %s5 = inlined_call_operand.vmem [shape: f32[32,32], index: 5, kind: input, shape index: {}]
  %s6 = inlined_call_operand.vmem [shape: f32[1,32], index: 6, kind: input, shape index: {}]
  %s7 = inlined_call_operand.hbm [shape: f32[16,32], index: 7, kind: output, shape index: {}]
  %s8 = sld [smem:[#allocation0]]
  $region61: #{cross_attention_forward.1} parent=0
    _
  %s10 = ssub.s32 1, %s8
  %s11 = scalar_select 0, %s10, %s8
  $region1: #{cross_attention_forward.1} parent=0
    #allocation2 [shape = 'u8[8192]{0}', space=vmem, size = 0x2000, scoped, tag = 'output window, operand 0']
    #allocation3 [shape = 's32[2]{0}', space=sflag, size = 0x8, scoped, tag = 'scoped memory for cross_attention_forward.1']
    %12 = vsyncpa [#allocation3], 0
    %s13 = scalar_lea.sflag [#allocation3], 1
    %14 = vsyncpa %s13, 0
    loop: start=0, step=1, limit=4
    $region2: #{cross_attention_forward.1} parent=1 // loop_pre_header
      _
    $region3: #{cross_attention_forward.1} parent=1 // loop_header
      %s16 = sphi 0, %s20
      %p17 = scmp.ge.s32.totalorder %s16, 4
      %s26 = sphi 0, %s28
      %s29 = sphi 0, %s26
      %s30 = sphi 0, %s29
      %s46 = sphi 0, %s30
      %s52 = sphi 0, %s54
      %s55 = sphi 0, %s52
      %s56 = sphi 0, %s55
      %s72 = sphi 0, %s56
      %s78 = sphi 0, %s80
      %s81 = sphi 0, %s78
      %s82 = sphi 0, %s81
      %s98 = sphi 0, %s82
      %s102 = sphi 0, %s102
      %s104 = sphi 0, %s102
      %s105 = sphi 0, %s104
      %s119 = sphi 0, %s105
      %s123 = sphi 0, %s123
      %s125 = sphi 0, %s123
      %s126 = sphi 0, %s125
      %s140 = sphi 0, %s126
      %s144 = sphi 0, %s144
      %s146 = sphi 0, %s144
      %s147 = sphi 0, %s146
      %s161 = sphi 0, %s147
      %s165 = sphi 0, %s165
      %s167 = sphi 0, %s165
      %s168 = sphi 0, %s167
      %s182 = sphi 0, %s168
      %s188 = sphi 0, %s190
      %s191 = sphi 0, %s188
      %s192 = sphi 0, %s191
      %s208 = sphi 0, %s192
    $region4: #{cross_attention_forward.1} parent=1 // loop_header_branch
      %19 = sbr.rel (%p17) target = $region8
    $region5: #{cross_attention_forward.1} parent=1 // loop_body
      %s21 = ssub.s32 %s16, 1
      %s22 = ssub.s32 %s16, 2
      %s23 = sadd.s32 %s16, 1
      %s24 = ssub.s32 %s16, %s23
      %p25 = scmp.eq.s32.totalorder %s24, 0
      %s27 = sadd.s32 %s26, 1
      %s28 = scalar_select %p25, %s26, %s27
      %p31 = pneg %p25
      %p32 = scmp.eq.s32.totalorder %s16, 1
      %p33 = por %p31, %p32
      %p34 = scmp.ne.s32.totalorder %s26, %s29
      %p35 = scmp.eq.s32.totalorder %s16, 0
      %p36 = por %p34, %p35
      %p37 = scmp.ne.s32.totalorder %s26, %s29
      %p38 = scmp.eq.s32.totalorder %s21, 1
      %p39 = por %p37, %p38
      %p40 = scmp.ne.s32.totalorder %s29, %s30
      %p41 = scmp.eq.s32.totalorder %s21, 0
      %p42 = por %p40, %p41
      %p43 = scmp.ne.s32.totalorder %s29, %s30
      %p44 = scmp.eq.s32.totalorder %s22, 1
      %p45 = por %p43, %p44
      %p47 = scmp.ne.s32.totalorder %s30, %s46
      %p48 = scmp.eq.s32.totalorder %s22, 0
      %p49 = por %p47, %p48
      %s50 = ssub.s32 %s16, %s23
      %p51 = scmp.eq.s32.totalorder %s50, 0
      %s53 = sadd.s32 %s52, 1
      %s54 = scalar_select %p51, %s52, %s53
      %p57 = pneg %p51
      %p58 = scmp.eq.s32.totalorder %s16, 1
      %p59 = por %p57, %p58
      %p60 = scmp.ne.s32.totalorder %s52, %s55
      %p61 = scmp.eq.s32.totalorder %s16, 0
      %p62 = por %p60, %p61
      %p63 = scmp.ne.s32.totalorder %s52, %s55
      %p64 = scmp.eq.s32.totalorder %s21, 1
      %p65 = por %p63, %p64
      %p66 = scmp.ne.s32.totalorder %s55, %s56
      %p67 = scmp.eq.s32.totalorder %s21, 0
      %p68 = por %p66, %p67
      %p69 = scmp.ne.s32.totalorder %s55, %s56
      %p70 = scmp.eq.s32.totalorder %s22, 1
      %p71 = por %p69, %p70
      %p73 = scmp.ne.s32.totalorder %s56, %s72
      %p74 = scmp.eq.s32.totalorder %s22, 0
      %p75 = por %p73, %p74
      %s76 = ssub.s32 %s16, %s23
      %p77 = scmp.eq.s32.totalorder %s76, 0
      %s79 = sadd.s32 %s78, 1
      %s80 = scalar_select %p77, %s78, %s79
      %p83 = pneg %p77
      %p84 = scmp.eq.s32.totalorder %s16, 1
      %p85 = por %p83, %p84
      %p86 = scmp.ne.s32.totalorder %s78, %s81
      %p87 = scmp.eq.s32.totalorder %s16, 0
      %p88 = por %p86, %p87
      %p89 = scmp.ne.s32.totalorder %s78, %s81
      %p90 = scmp.eq.s32.totalorder %s21, 1
      %p91 = por %p89, %p90
      %p92 = scmp.ne.s32.totalorder %s81, %s82
      %p93 = scmp.eq.s32.totalorder %s21, 0
      %p94 = por %p92, %p93
      %p95 = scmp.ne.s32.totalorder %s81, %s82
      %p96 = scmp.eq.s32.totalorder %s22, 1
      %p97 = por %p95, %p96
      %p99 = scmp.ne.s32.totalorder %s82, %s98
      %p100 = scmp.eq.s32.totalorder %s22, 0
      %p101 = por %p99, %p100
      %s103 = sadd.s32 %s102, 1
      %p106 = scmp.eq.s32.totalorder %s16, 1
      %p107 = scmp.ne.s32.totalorder %s102, %s104
      %p108 = scmp.eq.s32.totalorder %s16, 0
      %p109 = por %p107, %p108
      %p110 = scmp.ne.s32.totalorder %s102, %s104
      %p111 = scmp.eq.s32.totalorder %s21, 1
      %p112 = por %p110, %p111
      %p113 = scmp.ne.s32.totalorder %s104, %s105
      %p114 = scmp.eq.s32.totalorder %s21, 0
      %p115 = por %p113, %p114
      %p116 = scmp.ne.s32.totalorder %s104, %s105
      %p117 = scmp.eq.s32.totalorder %s22, 1
      %p118 = por %p116, %p117
      %p120 = scmp.ne.s32.totalorder %s105, %s119
      %p121 = scmp.eq.s32.totalorder %s22, 0
      %p122 = por %p120, %p121
      %s124 = sadd.s32 %s123, 1
      %p127 = scmp.eq.s32.totalorder %s16, 1
      %p128 = scmp.ne.s32.totalorder %s123, %s125
      %p129 = scmp.eq.s32.totalorder %s16, 0
      %p130 = por %p128, %p129
      %p131 = scmp.ne.s32.totalorder %s123, %s125
      %p132 = scmp.eq.s32.totalorder %s21, 1
      %p133 = por %p131, %p132
      %p134 = scmp.ne.s32.totalorder %s125, %s126
      %p135 = scmp.eq.s32.totalorder %s21, 0
      %p136 = por %p134, %p135
      %p137 = scmp.ne.s32.totalorder %s125, %s126
      %p138 = scmp.eq.s32.totalorder %s22, 1
      %p139 = por %p137, %p138
      %p141 = scmp.ne.s32.totalorder %s126, %s140
      %p142 = scmp.eq.s32.totalorder %s22, 0
      %p143 = por %p141, %p142
      %s145 = sadd.s32 %s144, 1
      %p148 = scmp.eq.s32.totalorder %s16, 1
      %p149 = scmp.ne.s32.totalorder %s144, %s146
      %p150 = scmp.eq.s32.totalorder %s16, 0
      %p151 = por %p149, %p150
      %p152 = scmp.ne.s32.totalorder %s144, %s146
      %p153 = scmp.eq.s32.totalorder %s21, 1
      %p154 = por %p152, %p153
      %p155 = scmp.ne.s32.totalorder %s146, %s147
      %p156 = scmp.eq.s32.totalorder %s21, 0
      %p157 = por %p155, %p156
      %p158 = scmp.ne.s32.totalorder %s146, %s147
      %p159 = scmp.eq.s32.totalorder %s22, 1
      %p160 = por %p158, %p159
      %p162 = scmp.ne.s32.totalorder %s147, %s161
      %p163 = scmp.eq.s32.totalorder %s22, 0
      %p164 = por %p162, %p163
      %s166 = sadd.s32 %s165, 1
      %p169 = scmp.eq.s32.totalorder %s16, 1
      %p170 = scmp.ne.s32.totalorder %s165, %s167
      %p171 = scmp.eq.s32.totalorder %s16, 0
      %p172 = por %p170, %p171
      %p173 = scmp.ne.s32.totalorder %s165, %s167
      %p174 = scmp.eq.s32.totalorder %s21, 1
      %p175 = por %p173, %p174
      %p176 = scmp.ne.s32.totalorder %s167, %s168
      %p177 = scmp.eq.s32.totalorder %s21, 0
      %p178 = por %p176, %p177
      %p179 = scmp.ne.s32.totalorder %s167, %s168
      %p180 = scmp.eq.s32.totalorder %s22, 1
      %p181 = por %p179, %p180
      %p183 = scmp.ne.s32.totalorder %s168, %s182
      %p184 = scmp.eq.s32.totalorder %s22, 0
      %p185 = por %p183, %p184
      %s186 = ssub.s32 %s16, %s23
      %p187 = scmp.eq.s32.totalorder %s186, 0
      %s189 = sadd.s32 %s188, 1
      %s190 = scalar_select %p187, %s188, %s189
      %p193 = pneg %p187
      %p194 = scmp.eq.s32.totalorder %s16, 1
      %p195 = por %p193, %p194
      %p196 = scmp.ne.s32.totalorder %s188, %s191
      %p197 = scmp.eq.s32.totalorder %s16, 0
      %p198 = por %p196, %p197
      %p199 = scmp.ne.s32.totalorder %s188, %s191
      %p200 = scmp.eq.s32.totalorder %s21, 1
      %p201 = por %p199, %p200
      %p202 = scmp.ne.s32.totalorder %s191, %s192
      %p203 = scmp.eq.s32.totalorder %s21, 0
      %p204 = por %p202, %p203
      %p205 = scmp.ne.s32.totalorder %s191, %s192
      %p206 = scmp.eq.s32.totalorder %s22, 1
      %p207 = por %p205, %p206
      %p209 = scmp.ne.s32.totalorder %s192, %s208
      %p210 = scmp.eq.s32.totalorder %s22, 0
      %p211 = por %p209, %p210
      %p212 = scmp.le.s32.totalorder 1, %s16
      %p213 = scmp.lt.s32.totalorder %s16, 3
      %p214 = pnand %p212, %p213
      %p215 = pneg %p214
      // Predicated region
      $region9: #{cross_attention_forward.1} parent=5 // pred_check
        _
      $region10: #{cross_attention_forward.1} parent=5 // pred_check_branch
        %217 = sbr.rel (%p214) target = $region12
      $region11: #{cross_attention_forward.1} parent=5 // pred_region
        %s218 = ssub.s32 %s16, 1
        // Predicated region
        $region13: #{cross_attention_forward.1} parent=11 // pred_check
          %p219 = pneg %p115
        $region14: #{cross_attention_forward.1} parent=11 // pred_check_branch
          %221 = sbr.rel (%p219) target = $region16
        $region15: #{cross_attention_forward.1} parent=11 // pred_region
          _
        $region16: #{cross_attention_forward.1} parent=11 // pred_fallthru
          _
        // Predicated region
        $region17: #{cross_attention_forward.1} parent=11 // pred_check
          %p222 = pneg %p136
        $region18: #{cross_attention_forward.1} parent=11 // pred_check_branch
          %224 = sbr.rel (%p222) target = $region20
        $region19: #{cross_attention_forward.1} parent=11 // pred_region
          _
        $region20: #{cross_attention_forward.1} parent=11 // pred_fallthru
          _
        // Predicated region
        $region21: #{cross_attention_forward.1} parent=11 // pred_check
          %p225 = pneg %p157
        $region22: #{cross_attention_forward.1} parent=11 // pred_check_branch
          %227 = sbr.rel (%p225) target = $region24
        $region23: #{cross_attention_forward.1} parent=11 // pred_region
          _
        $region24: #{cross_attention_forward.1} parent=11 // pred_fallthru
          _
        // Predicated region
        $region25: #{cross_attention_forward.1} parent=11 // pred_check
          %p228 = pneg %p178
        $region26: #{cross_attention_forward.1} parent=11 // pred_check_branch
          %230 = sbr.rel (%p228) target = $region28
        $region27: #{cross_attention_forward.1} parent=11 // pred_region
          _
        $region28: #{cross_attention_forward.1} parent=11 // pred_fallthru
          _
      $region12: #{cross_attention_forward.1} parent=5 // pred_fallthru
        _
      %p231 = scmp.lt.s32.totalorder %s16, 2
      // Predicated region
      $region29: #{cross_attention_forward.1} parent=5 // pred_check
        %p232 = pneg %p231
      $region30: #{cross_attention_forward.1} parent=5 // pred_check_branch
        %234 = sbr.rel (%p232) target = $region32
      $region31: #{cross_attention_forward.1} parent=5 // pred_region
        // Predicated region
        $region33: #{cross_attention_forward.1} parent=31 // pred_check
          %p235 = pneg %p36
        $region34: #{cross_attention_forward.1} parent=31 // pred_check_branch
          %237 = sbr.rel (%p235) target = $region36
        $region35: #{cross_attention_forward.1} parent=31 // pred_region
          %p238 = scmp.lt.s32.totalorder %s16, 1
          %s239 = scalar_select %p238, %s16, 1
          %s240 = smul.addr %s239, 8
          %s241 = scalar_lea.vmem %s0, %s240
        $region36: #{cross_attention_forward.1} parent=31 // pred_fallthru
          _
        // Predicated region
        $region37: #{cross_attention_forward.1} parent=31 // pred_check
          %p242 = pneg %p62
        $region38: #{cross_attention_forward.1} parent=31 // pred_check_branch
          %244 = sbr.rel (%p242) target = $region40
        $region39: #{cross_attention_forward.1} parent=31 // pred_region
          %s245 = smul.u32 2, %s16
          %p246 = scmp.lt.s32.totalorder %s245, 3
          %s247 = scalar_select %p246, %s245, 3
          %s248 = smul.addr %s247, 8
          %s249 = scalar_lea.vmem %s1, %s248
          %s250 = smul.u32 2, %s16
        $region40: #{cross_attention_forward.1} parent=31 // pred_fallthru
          _
        // Predicated region
        $region41: #{cross_attention_forward.1} parent=31 // pred_check
          %p251 = pneg %p88
        $region42: #{cross_attention_forward.1} parent=31 // pred_check_branch
          %253 = sbr.rel (%p251) target = $region44
        $region43: #{cross_attention_forward.1} parent=31 // pred_region
          %s254 = smul.u32 2, %s16
          %p255 = scmp.lt.s32.totalorder %s254, 3
          %s256 = scalar_select %p255, %s254, 3
          %s257 = smul.addr %s256, 8
          %s258 = scalar_lea.vmem %s2, %s257
          %s259 = smul.u32 2, %s16
        $region44: #{cross_attention_forward.1} parent=31 // pred_fallthru
          _
      $region32: #{cross_attention_forward.1} parent=5 // pred_fallthru
        _
      %p260 = scmp.le.s32.totalorder 1, %s16
      %p261 = scmp.lt.s32.totalorder %s16, 3
      %p262 = pnand %p260, %p261
      %p263 = pneg %p262
      // Predicated region
      $region45: #{cross_attention_forward.1} parent=5 // pred_check
        _
      $region46: #{cross_attention_forward.1} parent=5 // pred_check_branch
        %265 = sbr.rel (%p262) target = $region48
      $region47: #{cross_attention_forward.1} parent=5 // pred_region
        %s266 = ssub.s32 %s16, 1
        %p267 = scmp.lt.s32.totalorder %s21, 1
        %s268 = scalar_select %p267, %s21, 1
        %s269 = smul.addr %s268, 8
        %s270 = scalar_lea.vmem %s0, %s269
        %p271 = pneg %p42
        %p272 = pneg %p39
        %s273 = smul.u32 2, %s21
        %p274 = scmp.lt.s32.totalorder %s273, 3
        %s275 = scalar_select %p274, %s273, 3
        %s276 = smul.addr %s275, 8
        %s277 = scalar_lea.vmem %s1, %s276
        %p278 = pneg %p68
        %p279 = pneg %p65
        %s280 = smul.u32 2, %s21
        %p281 = scmp.lt.s32.totalorder %s280, 3
        %s282 = scalar_select %p281, %s280, 3
        %s283 = smul.addr %s282, 8
        %s284 = scalar_lea.vmem %s2, %s283
        %p285 = pneg %p94
        %p286 = pneg %p91
        %p287 = pneg %p115
        %p288 = pneg %p112
        %p289 = pneg %p136
        %p290 = pneg %p133
        %p291 = pneg %p157
        %p292 = pneg %p154
        %p293 = pneg %p178
        %p294 = pneg %p175
        %p295 = pneg %p204
        %p296 = pneg %p201
        %s297 = sand.u32 %s191, 1
        %s298 = scalar_lea.sflag [#allocation3], %s297
        %s299 = sand.u32 %s191, 1
        %s300 = smul.addr %s299, 8
        %s301 = scalar_lea.vmem [#allocation2], %s300
        %p302 = scmp.lt.s32.totalorder %s21, 1
        %s303 = scalar_select %p302, %s21, 1
        %s304 = smul.addr %s303, 8
        %s305 = scalar_lea.vmem %s0, %s304
        %s306 = smul.u32 2, %s21
        %p307 = scmp.lt.s32.totalorder %s306, 3
        %s308 = scalar_select %p307, %s306, 3
        %s309 = smul.addr %s308, 8
        %s310 = scalar_lea.vmem %s1, %s309
        %s311 = smul.u32 2, %s21
        %s312 = smul.u32 2, %s21
        %p313 = scmp.lt.s32.totalorder %s312, 3
        %s314 = scalar_select %p313, %s312, 3
        %s315 = smul.addr %s314, 8
        %s316 = scalar_lea.vmem %s2, %s315
        %s317 = smul.u32 2, %s21
        %v318 = vld [vmem:[%s3] sm:$0xff]
        %v319 = vld [vmem:[%s3 + $0x8] sm:$0xff]
        %v320 = vld [vmem:[%s3 + $0x10] sm:$0xff]
        %v321 = vld [vmem:[%s3 + $0x18] sm:$0xff]
        %v322 = vld [vmem:[%s3 + $0x20] sm:$0xff]
        %v323 = vld [vmem:[%s3 + $0x28] sm:$0xff]
        %v324 = vld [vmem:[%s3 + $0x30] sm:$0xff]
        %v325 = vld [vmem:[%s3 + $0x38] sm:$0xff]
        %v326 = vld [vmem:[%s3 + $0x40] sm:$0xff]
        %v327 = vld [vmem:[%s3 + $0x48] sm:$0xff]
        %v328 = vld [vmem:[%s3 + $0x50] sm:$0xff]
        %v329 = vld [vmem:[%s3 + $0x58] sm:$0xff]
        %v330 = vld [vmem:[%s4] sm:$0x7]
        %v331 = vld [vmem:[%s305] sm:$0xff]
        %v332 = vlaneseq
        %v333 = vshrl.u32 %v332, 7
        %v334 = vsub.s32 0, %v333
        %v335 = vrot.slane %v330, %v334
        %vm336 = vcmask 261120
        %v338 = vsel %vm336, %v331, 0
        %v341 = vsel %vm336, %v318, 0
        %v344 = vsel %vm336, %v319, 0
        %v347 = vsel %vm336, %v320, 0
        %v350 = vsel %vm336, %v321, 0
        %352 = vmatprep.subr.mxu0 0.0
        %353 = vmatpush1.xpose.msra.mxu0 0.0
        %354 = vmatprep.subr.mxu0 0.0
        %355 = vmatpush1.xpose.msra.mxu0 0.0
        %356 = vmatprep.subr.mxu0 0.0
        %357 = vmatpush1.xpose.msra.mxu0 0.0
        %358 = vmatprep.subr.mxu0 0.0
        %359 = vmatpush1.xpose.msra.mxu0 0.0
        %360 = vmatprep.subr.mxu0 0.0
        %361 = vmatpush1.xpose.msra.mxu0 0.0
        %362 = vmatprep.subr.mxu0 0.0
        %363 = vmatpush1.xpose.msra.mxu0 0.0
        %364 = vmatprep.subr.mxu0 0.0
        %365 = vmatpush1.xpose.msra.mxu0 0.0
        %366 = vmatprep.subr.mxu0 0.0
        %367 = vmatpush1.xpose.msra.mxu0 0.0
        %368 = vmatprep.subr.mxu0 0.0
        %369 = vmatpush1.xpose.msra.mxu0 0.0
        %370 = vmatprep.subr.mxu0 0.0
        %371 = vmatpush1.xpose.msra.mxu0 0.0
        %372 = vmatprep.subr.mxu0 0.0
        %373 = vmatpush1.xpose.msra.mxu0 0.0
        %374 = vmatprep.subr.mxu0 0.0
        %375 = vmatpush1.xpose.msra.mxu0 0.0
        %376 = vmatprep.subr.mxu0 0.0
        %377 = vmatpush1.xpose.msra.mxu0 %v350
        %378 = vmatprep.subr.mxu0 0.0
        %379 = vmatpush1.xpose.msra.mxu0 %v347
        %380 = vmatprep.subr.mxu0 0.0
        %381 = vmatpush1.xpose.msra.mxu0 %v344
        %382 = vmatprep.subr.mxu0 0.0
        %383 = vmatpush1.xpose.msra.mxu0 %v341
        %384 = vmatprep.subr.mxu0 0.0
        %385 = vmatpush2.xpose.msra.mxu0 0.0
        %386 = vmatprep.subr.mxu0 0.0
        %387 = vmatpush2.xpose.msra.mxu0 0.0
        %388 = vmatprep.subr.mxu0 0.0
        %389 = vmatpush2.xpose.msra.mxu0 0.0
        %390 = vmatprep.subr.mxu0 0.0
        %391 = vmatpush2.xpose.msra.mxu0 0.0
        %392 = vmatprep.subr.mxu0 0.0
        %393 = vmatpush2.xpose.msra.mxu0 0.0
        %394 = vmatprep.subr.mxu0 0.0
        %395 = vmatpush2.xpose.msra.mxu0 0.0
        %396 = vmatprep.subr.mxu0 0.0
        %397 = vmatpush2.xpose.msra.mxu0 0.0
        %398 = vmatprep.subr.mxu0 0.0
        %399 = vmatpush2.xpose.msra.mxu0 0.0
        %400 = vmatprep.subr.mxu0 0.0
        %401 = vmatpush2.xpose.msra.mxu0 0.0
        %402 = vmatprep.subr.mxu0 0.0
        %403 = vmatpush2.xpose.msra.mxu0 0.0
        %404 = vmatprep.subr.mxu0 0.0
        %405 = vmatpush2.xpose.msra.mxu0 0.0
        %406 = vmatprep.subr.mxu0 0.0
        %407 = vmatpush2.xpose.msra.mxu0 0.0
        %408 = vmatprep.subr.mxu0 0.0
        %409 = vmatpush2.xpose.msra.mxu0 0.0
        %410 = vmatprep.subr.mxu0 0.0
        %411 = vmatpush2.xpose.msra.mxu0 0.0
        %412 = vmatprep.subr.mxu0 0.0
        %413 = vmatpush2.xpose.msra.mxu0 0.0
        %414 = vmatprep.subr.mxu0 0.0
        %415 = vmatpush2.xpose.msra.mxu0 0.0
        %416 = vmatprep.mubr.f32.mxu0 0.0
        %417 = vmatmul.mubr.f32.gmra.mxu0 %v338
        %v418 = vpop.f32.mrf.mxu0
        %v419 = vadd.f32 %v335, %v418
        %v420 = vpop.f32.mrf.mxu0
        %421 = vdwg.mxu0
        %v422 = vld [vmem:[%s310] sm:$0xff]
        %v423 = vld [vmem:[%s310 + $0x8] sm:$0xff]
        %v424 = vlaneseq
        %v425 = vshrl.u32 %v424, 7
        %v426 = vsub.s32 1, %v425
        %v427 = vrot.slane %v330, %v426
        %v429 = vsel %vm336, %v422, 0
        %v432 = vsel %vm336, %v423, 0
        %v435 = vsel %vm336, %v322, 0
        %v438 = vsel %vm336, %v323, 0
        %v441 = vsel %vm336, %v324, 0
        %v444 = vsel %vm336, %v325, 0
        %446 = vmatprep.subr.mxu0 0.0
        %447 = vmatpush1.xpose.msra.mxu0 0.0
        %448 = vmatprep.subr.mxu0 0.0
        %449 = vmatpush1.xpose.msra.mxu0 0.0
        %450 = vmatprep.subr.mxu0 0.0
        %451 = vmatpush1.xpose.msra.mxu0 0.0
        %452 = vmatprep.subr.mxu0 0.0
        %453 = vmatpush1.xpose.msra.mxu0 0.0
        %454 = vmatprep.subr.mxu0 0.0
        %455 = vmatpush1.xpose.msra.mxu0 0.0
        %456 = vmatprep.subr.mxu0 0.0
        %457 = vmatpush1.xpose.msra.mxu0 0.0
        %458 = vmatprep.subr.mxu0 0.0
        %459 = vmatpush1.xpose.msra.mxu0 0.0
        %460 = vmatprep.subr.mxu0 0.0
        %461 = vmatpush1.xpose.msra.mxu0 0.0
        %462 = vmatprep.subr.mxu0 0.0
        %463 = vmatpush1.xpose.msra.mxu0 0.0
        %464 = vmatprep.subr.mxu0 0.0
        %465 = vmatpush1.xpose.msra.mxu0 0.0
        %466 = vmatprep.subr.mxu0 0.0
        %467 = vmatpush1.xpose.msra.mxu0 0.0
        %468 = vmatprep.subr.mxu0 0.0
        %469 = vmatpush1.xpose.msra.mxu0 0.0
        %470 = vmatprep.subr.mxu0 0.0
        %471 = vmatpush1.xpose.msra.mxu0 %v444
        %472 = vmatprep.subr.mxu0 0.0
        %473 = vmatpush1.xpose.msra.mxu0 %v441
        %474 = vmatprep.subr.mxu0 0.0
        %475 = vmatpush1.xpose.msra.mxu0 %v438
        %476 = vmatprep.subr.mxu0 0.0
        %477 = vmatpush1.xpose.msra.mxu0 %v435
        %478 = vmatprep.subr.mxu0 0.0
        %479 = vmatpush2.xpose.msra.mxu0 0.0
        %480 = vmatprep.subr.mxu0 0.0
        %481 = vmatpush2.xpose.msra.mxu0 0.0
        %482 = vmatprep.subr.mxu0 0.0
        %483 = vmatpush2.xpose.msra.mxu0 0.0
        %484 = vmatprep.subr.mxu0 0.0
        %485 = vmatpush2.xpose.msra.mxu0 0.0
        %486 = vmatprep.subr.mxu0 0.0
        %487 = vmatpush2.xpose.msra.mxu0 0.0
        %488 = vmatprep.subr.mxu0 0.0
        %489 = vmatpush2.xpose.msra.mxu0 0.0
        %490 = vmatprep.subr.mxu0 0.0
        %491 = vmatpush2.xpose.msra.mxu0 0.0
        %492 = vmatprep.subr.mxu0 0.0
        %493 = vmatpush2.xpose.msra.mxu0 0.0
        %494 = vmatprep.subr.mxu0 0.0
        %495 = vmatpush2.xpose.msra.mxu0 0.0
        %496 = vmatprep.subr.mxu0 0.0
        %497 = vmatpush2.xpose.msra.mxu0 0.0
        %498 = vmatprep.subr.mxu0 0.0
        %499 = vmatpush2.xpose.msra.mxu0 0.0
        %500 = vmatprep.subr.mxu0 0.0
        %501 = vmatpush2.xpose.msra.mxu0 0.0
        %502 = vmatprep.subr.mxu0 0.0
        %503 = vmatpush2.xpose.msra.mxu0 0.0
        %504 = vmatprep.subr.mxu0 0.0
        %505 = vmatpush2.xpose.msra.mxu0 0.0
        %506 = vmatprep.subr.mxu0 0.0
        %507 = vmatpush2.xpose.msra.mxu0 0.0
        %508 = vmatprep.subr.mxu0 0.0
        %509 = vmatpush2.xpose.msra.mxu0 0.0
        %510 = vmatprep.mubr.f32.mxu0 0.0
        %511 = vmatmul.mubr.f32.gmra.mxu0 %v429
        %v512 = vpop.f32.mrf.mxu0
        %v513 = vadd.f32 %v427, %v512
        %v514 = vpop.f32.mrf.mxu0
        %515 = vmatprep.mubr.f32.mxu0 0.0
        %516 = vmatmul.mubr.f32.gmra.mxu0 %v432
        %v517 = vpop.f32.mrf.mxu0
        %v518 = vadd.f32 %v427, %v517
        %v519 = vpop.f32.mrf.mxu0
        %520 = vdwg.mxu0
        %v521 = vld [vmem:[%s316] sm:$0xff]
        %v522 = vld [vmem:[%s316 + $0x8] sm:$0xff]
        %v523 = vlaneseq
        %v524 = vshrl.u32 %v523, 7
        %v525 = vsub.s32 2, %v524
        %v526 = vrot.slane %v330, %v525
        %v528 = vsel %vm336, %v521, 0
        %v531 = vsel %vm336, %v522, 0
        %v534 = vsel %vm336, %v326, 0
        %v537 = vsel %vm336, %v327, 0
        %v540 = vsel %vm336, %v328, 0
        %v543 = vsel %vm336, %v329, 0
        %545 = vmatprep.subr.mxu0 0.0
        %546 = vmatpush1.xpose.msra.mxu0 0.0
        %547 = vmatprep.subr.mxu0 0.0
        %548 = vmatpush1.xpose.msra.mxu0 0.0
        %549 = vmatprep.subr.mxu0 0.0
        %550 = vmatpush1.xpose.msra.mxu0 0.0
        %551 = vmatprep.subr.mxu0 0.0
        %552 = vmatpush1.xpose.msra.mxu0 0.0
        %553 = vmatprep.subr.mxu0 0.0
        %554 = vmatpush1.xpose.msra.mxu0 0.0
        %555 = vmatprep.subr.mxu0 0.0
        %556 = vmatpush1.xpose.msra.mxu0 0.0
        %557 = vmatprep.subr.mxu0 0.0
        %558 = vmatpush1.xpose.msra.mxu0 0.0
        %559 = vmatprep.subr.mxu0 0.0
        %560 = vmatpush1.xpose.msra.mxu0 0.0
        %561 = vmatprep.subr.mxu0 0.0
        %562 = vmatpush1.xpose.msra.mxu0 0.0
        %563 = vmatprep.subr.mxu0 0.0
        %564 = vmatpush1.xpose.msra.mxu0 0.0
        %565 = vmatprep.subr.mxu0 0.0
        %566 = vmatpush1.xpose.msra.mxu0 0.0
        %567 = vmatprep.subr.mxu0 0.0
        %568 = vmatpush1.xpose.msra.mxu0 0.0
        %569 = vmatprep.subr.mxu0 0.0
        %570 = vmatpush1.xpose.msra.mxu0 %v543
        %571 = vmatprep.subr.mxu0 0.0
        %572 = vmatpush1.xpose.msra.mxu0 %v540
        %573 = vmatprep.subr.mxu0 0.0
        %574 = vmatpush1.xpose.msra.mxu0 %v537
        %575 = vmatprep.subr.mxu0 0.0
        %576 = vmatpush1.xpose.msra.mxu0 %v534
        %577 = vmatprep.subr.mxu0 0.0
        %578 = vmatpush2.xpose.msra.mxu0 0.0
        %579 = vmatprep.subr.mxu0 0.0
        %580 = vmatpush2.xpose.msra.mxu0 0.0
        %581 = vmatprep.subr.mxu0 0.0
        %582 = vmatpush2.xpose.msra.mxu0 0.0
        %583 = vmatprep.subr.mxu0 0.0
        %584 = vmatpush2.xpose.msra.mxu0 0.0
        %585 = vmatprep.subr.mxu0 0.0
        %586 = vmatpush2.xpose.msra.mxu0 0.0
        %587 = vmatprep.subr.mxu0 0.0
        %588 = vmatpush2.xpose.msra.mxu0 0.0
        %589 = vmatprep.subr.mxu0 0.0
        %590 = vmatpush2.xpose.msra.mxu0 0.0
        %591 = vmatprep.subr.mxu0 0.0
        %592 = vmatpush2.xpose.msra.mxu0 0.0
        %593 = vmatprep.subr.mxu0 0.0
        %594 = vmatpush2.xpose.msra.mxu0 0.0
        %595 = vmatprep.subr.mxu0 0.0
        %596 = vmatpush2.xpose.msra.mxu0 0.0
        %597 = vmatprep.subr.mxu0 0.0
        %598 = vmatpush2.xpose.msra.mxu0 0.0
        %599 = vmatprep.subr.mxu0 0.0
        %600 = vmatpush2.xpose.msra.mxu0 0.0
        %601 = vmatprep.subr.mxu0 0.0
        %602 = vmatpush2.xpose.msra.mxu0 0.0
        %603 = vmatprep.subr.mxu0 0.0
        %604 = vmatpush2.xpose.msra.mxu0 0.0
        %605 = vmatprep.subr.mxu0 0.0
        %606 = vmatpush2.xpose.msra.mxu0 0.0
        %607 = vmatprep.subr.mxu0 0.0
        %608 = vmatpush2.xpose.msra.mxu0 0.0
        %609 = vmatprep.mubr.f32.mxu0 0.0
        %610 = vmatmul.mubr.f32.gmra.mxu0 %v528
        %v611 = vpop.f32.mrf.mxu0
        %v612 = vadd.f32 %v526, %v611
        %v613 = vpop.f32.mrf.mxu0
        %614 = vmatprep.mubr.f32.mxu0 0.0
        %615 = vmatmul.mubr.f32.gmra.mxu0 %v531
        %v616 = vpop.f32.mrf.mxu0
        %v617 = vadd.f32 %v526, %v616
        %v618 = vpop.f32.mrf.mxu0
        %619 = vdwg.mxu0
        %v620 = vmul.f32 %v419, 0.35355338
        %vm621 = vcmask 64512
        %v623 = vsel %vm621, %v620, 0
        %v626 = vsel %vm621, %v513, 0
        %v629 = vsel %vm621, %v518, 0
        %631 = vmatprep.subr.mxu0 0.0
        %632 = vmatpush1.xpose.msra.mxu0 0.0
        %633 = vmatprep.subr.mxu0 0.0
        %634 = vmatpush1.xpose.msra.mxu0 0.0
        %635 = vmatprep.subr.mxu0 0.0
        %636 = vmatpush1.xpose.msra.mxu0 0.0
        %637 = vmatprep.subr.mxu0 0.0
        %638 = vmatpush1.xpose.msra.mxu0 0.0
        %639 = vmatprep.subr.mxu0 0.0
        %640 = vmatpush1.xpose.msra.mxu0 0.0
        %641 = vmatprep.subr.mxu0 0.0
        %642 = vmatpush1.xpose.msra.mxu0 0.0
        %643 = vmatprep.subr.mxu0 0.0
        %644 = vmatpush1.xpose.msra.mxu0 0.0
        %645 = vmatprep.subr.mxu0 0.0
        %646 = vmatpush1.xpose.msra.mxu0 0.0
        %647 = vmatprep.subr.mxu0 0.0
        %648 = vmatpush1.xpose.msra.mxu0 0.0
        %649 = vmatprep.subr.mxu0 0.0
        %650 = vmatpush1.xpose.msra.mxu0 0.0
        %651 = vmatprep.subr.mxu0 0.0
        %652 = vmatpush1.xpose.msra.mxu0 0.0
        %653 = vmatprep.subr.mxu0 0.0
        %654 = vmatpush1.xpose.msra.mxu0 0.0
        %655 = vmatprep.subr.mxu0 0.0
        %656 = vmatpush1.xpose.msra.mxu0 0.0
        %657 = vmatprep.subr.mxu0 0.0
        %658 = vmatpush1.xpose.msra.mxu0 0.0
        %659 = vmatprep.subr.mxu0 0.0
        %660 = vmatpush1.xpose.msra.mxu0 %v629
        %661 = vmatprep.subr.mxu0 0.0
        %662 = vmatpush1.xpose.msra.mxu0 %v626
        %663 = vmatprep.subr.mxu0 0.0
        %664 = vmatpush2.xpose.msra.mxu0 0.0
        %665 = vmatprep.subr.mxu0 0.0
        %666 = vmatpush2.xpose.msra.mxu0 0.0
        %667 = vmatprep.subr.mxu0 0.0
        %668 = vmatpush2.xpose.msra.mxu0 0.0
        %669 = vmatprep.subr.mxu0 0.0
        %670 = vmatpush2.xpose.msra.mxu0 0.0
        %671 = vmatprep.subr.mxu0 0.0
        %672 = vmatpush2.xpose.msra.mxu0 0.0
        %673 = vmatprep.subr.mxu0 0.0
        %674 = vmatpush2.xpose.msra.mxu0 0.0
        %675 = vmatprep.subr.mxu0 0.0
        %676 = vmatpush2.xpose.msra.mxu0 0.0
        %677 = vmatprep.subr.mxu0 0.0
        %678 = vmatpush2.xpose.msra.mxu0 0.0
        %679 = vmatprep.subr.mxu0 0.0
        %680 = vmatpush2.xpose.msra.mxu0 0.0
        %681 = vmatprep.subr.mxu0 0.0
        %682 = vmatpush2.xpose.msra.mxu0 0.0
        %683 = vmatprep.subr.mxu0 0.0
        %684 = vmatpush2.xpose.msra.mxu0 0.0
        %685 = vmatprep.subr.mxu0 0.0
        %686 = vmatpush2.xpose.msra.mxu0 0.0
        %687 = vmatprep.subr.mxu0 0.0
        %688 = vmatpush2.xpose.msra.mxu0 0.0
        %689 = vmatprep.subr.mxu0 0.0
        %690 = vmatpush2.xpose.msra.mxu0 0.0
        %691 = vmatprep.subr.mxu0 0.0
        %692 = vmatpush2.xpose.msra.mxu0 0.0
        %693 = vmatprep.subr.mxu0 0.0
        %694 = vmatpush2.xpose.msra.mxu0 0.0
        %695 = vmatprep.mubr.f32.mxu0 0.0
        %696 = vmatmul.mubr.f32.gmra.mxu0 %v623
        %v697 = vpop.f32.mrf.mxu0
        %v698 = vadd.f32 0.0, %v697
        %v699 = vpop.f32.mrf.mxu0
        %700 = vdwg.mxu0
        %vm701 = vcmask 130048
        %v702 = vsel %vm701, %v698, -inf
        %703 = vmax.xlane.f32.xlu0 %v702
        %v704 = vpop.xlane.xlu0 %703
        %v705 = vsub.f32 %v698, %v704
        %v706 = vmul.f32 %v705, 1.442695
        %v707 = vpow.pop %v706
        %v708 = vsel %vm701, %v707, 0.0
        %709 = vadd.xlane.f32.xlu0 %v708
        %v710 = vpop.xlane.xlu0 %709
        %v712 = vsel %vm701, %v707, 0
        %714 = vmatprep.subr.mxu0 0.0
        %715 = vmatpush1.msra.mxu0 0.0
        %716 = vmatprep.subr.mxu0 0.0
        %717 = vmatpush1.msra.mxu0 0.0
        %718 = vmatprep.subr.mxu0 0.0
        %719 = vmatpush1.msra.mxu0 0.0
        %720 = vmatprep.subr.mxu0 0.0
        %721 = vmatpush1.msra.mxu0 0.0
        %722 = vmatprep.subr.mxu0 0.0
        %723 = vmatpush1.msra.mxu0 0.0
        %724 = vmatprep.subr.mxu0 0.0
        %725 = vmatpush1.msra.mxu0 0.0
        %726 = vmatprep.subr.mxu0 0.0
        %727 = vmatpush1.msra.mxu0 0.0
        %728 = vmatprep.subr.mxu0 0.0
        %729 = vmatpush1.msra.mxu0 0.0
        %730 = vmatprep.subr.mxu0 0.0
        %731 = vmatpush1.msra.mxu0 0.0
        %732 = vmatprep.subr.mxu0 0.0
        %733 = vmatpush1.msra.mxu0 0.0
        %734 = vmatprep.subr.mxu0 0.0
        %735 = vmatpush1.msra.mxu0 0.0
        %736 = vmatprep.subr.mxu0 0.0
        %737 = vmatpush1.msra.mxu0 0.0
        %738 = vmatprep.subr.mxu0 0.0
        %739 = vmatpush1.msra.mxu0 0.0
        %740 = vmatprep.subr.mxu0 0.0
        %741 = vmatpush1.msra.mxu0 0.0
        %742 = vmatprep.subr.mxu0 0.0
        %743 = vmatpush1.msra.mxu0 %v617
        %744 = vmatprep.subr.mxu0 0.0
        %745 = vmatpush1.msra.mxu0 %v612
        %746 = vmatprep.subr.mxu0 0.0
        %747 = vmatpush2.msra.mxu0 0.0
        %748 = vmatprep.subr.mxu0 0.0
        %749 = vmatpush2.msra.mxu0 0.0
        %750 = vmatprep.subr.mxu0 0.0
        %751 = vmatpush2.msra.mxu0 0.0
        %752 = vmatprep.subr.mxu0 0.0
        %753 = vmatpush2.msra.mxu0 0.0
        %754 = vmatprep.subr.mxu0 0.0
        %755 = vmatpush2.msra.mxu0 0.0
        %756 = vmatprep.subr.mxu0 0.0
        %757 = vmatpush2.msra.mxu0 0.0
        %758 = vmatprep.subr.mxu0 0.0
        %759 = vmatpush2.msra.mxu0 0.0
        %760 = vmatprep.subr.mxu0 0.0
        %761 = vmatpush2.msra.mxu0 0.0
        %762 = vmatprep.subr.mxu0 0.0
        %763 = vmatpush2.msra.mxu0 0.0
        %764 = vmatprep.subr.mxu0 0.0
        %765 = vmatpush2.msra.mxu0 0.0
        %766 = vmatprep.subr.mxu0 0.0
        %767 = vmatpush2.msra.mxu0 0.0
        %768 = vmatprep.subr.mxu0 0.0
        %769 = vmatpush2.msra.mxu0 0.0
        %770 = vmatprep.subr.mxu0 0.0
        %771 = vmatpush2.msra.mxu0 0.0
        %772 = vmatprep.subr.mxu0 0.0
        %773 = vmatpush2.msra.mxu0 0.0
        %774 = vmatprep.subr.mxu0 0.0
        %775 = vmatpush2.msra.mxu0 0.0
        %776 = vmatprep.subr.mxu0 0.0
        %777 = vmatpush2.msra.mxu0 0.0
        %778 = vmatprep.mubr.f32.mxu0 0.0
        %779 = vmatmul.mubr.f32.gmra.mxu0 %v712
        %v780 = vpop.f32.mrf.mxu0
        %v781 = vadd.f32 0.0, %v780
        %v782 = vpop.f32.mrf.mxu0
        %783 = vdwg.mxu0
        %v784 = vrcp.pop %v710
        %v785 = vmul.f32 %v781, %v784
        %786 = vrot.lane.b32.xlu0 %v620, 120
        %v787 = vpop.permute.xlu0 %786
        %788 = vrot.lane.b32.xlu0 %v513, 120
        %v789 = vpop.permute.xlu0 %788
        %790 = vrot.lane.b32.xlu0 %v518, 120
        %v791 = vpop.permute.xlu0 %790
        %v792 = vsel %vm621, %v787, 0
        %v794 = vsel %vm621, %v789, 0
        %v796 = vsel %vm621, %v791, 0
        %798 = vmatprep.subr.mxu0 0.0
        %799 = vmatpush1.xpose.msra.mxu0 0.0
        %800 = vmatprep.subr.mxu0 0.0
        %801 = vmatpush1.xpose.msra.mxu0 0.0
        %802 = vmatprep.subr.mxu0 0.0
        %803 = vmatpush1.xpose.msra.mxu0 0.0
        %804 = vmatprep.subr.mxu0 0.0
        %805 = vmatpush1.xpose.msra.mxu0 0.0
        %806 = vmatprep.subr.mxu0 0.0
        %807 = vmatpush1.xpose.msra.mxu0 0.0
        %808 = vmatprep.subr.mxu0 0.0
        %809 = vmatpush1.xpose.msra.mxu0 0.0
        %810 = vmatprep.subr.mxu0 0.0
        %811 = vmatpush1.xpose.msra.mxu0 0.0
        %812 = vmatprep.subr.mxu0 0.0
        %813 = vmatpush1.xpose.msra.mxu0 0.0
        %814 = vmatprep.subr.mxu0 0.0
        %815 = vmatpush1.xpose.msra.mxu0 0.0
        %816 = vmatprep.subr.mxu0 0.0
        %817 = vmatpush1.xpose.msra.mxu0 0.0
        %818 = vmatprep.subr.mxu0 0.0
        %819 = vmatpush1.xpose.msra.mxu0 0.0
        %820 = vmatprep.subr.mxu0 0.0
        %821 = vmatpush1.xpose.msra.mxu0 0.0
        %822 = vmatprep.subr.mxu0 0.0
        %823 = vmatpush1.xpose.msra.mxu0 0.0
        %824 = vmatprep.subr.mxu0 0.0
        %825 = vmatpush1.xpose.msra.mxu0 0.0
        %826 = vmatprep.subr.mxu0 0.0
        %827 = vmatpush1.xpose.msra.mxu0 %v796
        %828 = vmatprep.subr.mxu0 0.0
        %829 = vmatpush1.xpose.msra.mxu0 %v794
        %830 = vmatprep.subr.mxu0 0.0
        %831 = vmatpush2.xpose.msra.mxu0 0.0
        %832 = vmatprep.subr.mxu0 0.0
        %833 = vmatpush2.xpose.msra.mxu0 0.0
        %834 = vmatprep.subr.mxu0 0.0
        %835 = vmatpush2.xpose.msra.mxu0 0.0
        %836 = vmatprep.subr.mxu0 0.0
        %837 = vmatpush2.xpose.msra.mxu0 0.0
        %838 = vmatprep.subr.mxu0 0.0
        %839 = vmatpush2.xpose.msra.mxu0 0.0
        %840 = vmatprep.subr.mxu0 0.0
        %841 = vmatpush2.xpose.msra.mxu0 0.0
        %842 = vmatprep.subr.mxu0 0.0
        %843 = vmatpush2.xpose.msra.mxu0 0.0
        %844 = vmatprep.subr.mxu0 0.0
        %845 = vmatpush2.xpose.msra.mxu0 0.0
        %846 = vmatprep.subr.mxu0 0.0
        %847 = vmatpush2.xpose.msra.mxu0 0.0
        %848 = vmatprep.subr.mxu0 0.0
        %849 = vmatpush2.xpose.msra.mxu0 0.0
        %850 = vmatprep.subr.mxu0 0.0
        %851 = vmatpush2.xpose.msra.mxu0 0.0
        %852 = vmatprep.subr.mxu0 0.0
        %853 = vmatpush2.xpose.msra.mxu0 0.0
        %854 = vmatprep.subr.mxu0 0.0
        %855 = vmatpush2.xpose.msra.mxu0 0.0
        %856 = vmatprep.subr.mxu0 0.0
        %857 = vmatpush2.xpose.msra.mxu0 0.0
        %858 = vmatprep.subr.mxu0 0.0
        %859 = vmatpush2.xpose.msra.mxu0 0.0
        %860 = vmatprep.subr.mxu0 0.0
        %861 = vmatpush2.xpose.msra.mxu0 0.0
        %862 = vmatprep.mubr.f32.mxu0 0.0
        %863 = vmatmul.mubr.f32.gmra.mxu0 %v792
        %v864 = vpop.f32.mrf.mxu0
        %v865 = vadd.f32 0.0, %v864
        %v866 = vpop.f32.mrf.mxu0
        %867 = vdwg.mxu0
        %v868 = vsel %vm701, %v865, -inf
        %869 = vmax.xlane.f32.xlu0 %v868
        %v870 = vpop.xlane.xlu0 %869
        %v871 = vsub.f32 %v865, %v870
        %v872 = vmul.f32 %v871, 1.442695
        %v873 = vpow.pop %v872
        %v874 = vsel %vm701, %v873, 0.0
        %875 = vadd.xlane.f32.xlu0 %v874
        %v876 = vpop.xlane.xlu0 %875
        %879 = vrot.lane.b32.xlu0 %v612, 120
        %v880 = vpop.permute.xlu0 %879
        %881 = vrot.lane.b32.xlu0 %v617, 120
        %v882 = vpop.permute.xlu0 %881
        %v886 = vsel %vm701, %v873, 0
        %888 = vmatprep.subr.mxu0 0.0
        %889 = vmatpush1.msra.mxu0 0.0
        %890 = vmatprep.subr.mxu0 0.0
        %891 = vmatpush1.msra.mxu0 0.0
        %892 = vmatprep.subr.mxu0 0.0
        %893 = vmatpush1.msra.mxu0 0.0
        %894 = vmatprep.subr.mxu0 0.0
        %895 = vmatpush1.msra.mxu0 0.0
        %896 = vmatprep.subr.mxu0 0.0
        %897 = vmatpush1.msra.mxu0 0.0
        %898 = vmatprep.subr.mxu0 0.0
        %899 = vmatpush1.msra.mxu0 0.0
        %900 = vmatprep.subr.mxu0 0.0
        %901 = vmatpush1.msra.mxu0 0.0
        %902 = vmatprep.subr.mxu0 0.0
        %903 = vmatpush1.msra.mxu0 0.0
        %904 = vmatprep.subr.mxu0 0.0
        %905 = vmatpush1.msra.mxu0 0.0
        %906 = vmatprep.subr.mxu0 0.0
        %907 = vmatpush1.msra.mxu0 0.0
        %908 = vmatprep.subr.mxu0 0.0
        %909 = vmatpush1.msra.mxu0 0.0
        %910 = vmatprep.subr.mxu0 0.0
        %911 = vmatpush1.msra.mxu0 0.0
        %912 = vmatprep.subr.mxu0 0.0
        %913 = vmatpush1.msra.mxu0 0.0
        %914 = vmatprep.subr.mxu0 0.0
        %915 = vmatpush1.msra.mxu0 0.0
        %916 = vmatprep.subr.mxu0 0.0
        %917 = vmatpush1.msra.mxu0 %v882
        %918 = vmatprep.subr.mxu0 0.0
        %919 = vmatpush1.msra.mxu0 %v880
        %920 = vmatprep.subr.mxu0 0.0
        %921 = vmatpush2.msra.mxu0 0.0
        %922 = vmatprep.subr.mxu0 0.0
        %923 = vmatpush2.msra.mxu0 0.0
        %924 = vmatprep.subr.mxu0 0.0
        %925 = vmatpush2.msra.mxu0 0.0
        %926 = vmatprep.subr.mxu0 0.0
        %927 = vmatpush2.msra.mxu0 0.0
        %928 = vmatprep.subr.mxu0 0.0
        %929 = vmatpush2.msra.mxu0 0.0
        %930 = vmatprep.subr.mxu0 0.0
        %931 = vmatpush2.msra.mxu0 0.0
        %932 = vmatprep.subr.mxu0 0.0
        %933 = vmatpush2.msra.mxu0 0.0
        %934 = vmatprep.subr.mxu0 0.0
        %935 = vmatpush2.msra.mxu0 0.0
        %936 = vmatprep.subr.mxu0 0.0
        %937 = vmatpush2.msra.mxu0 0.0
        %938 = vmatprep.subr.mxu0 0.0
        %939 = vmatpush2.msra.mxu0 0.0
        %940 = vmatprep.subr.mxu0 0.0
        %941 = vmatpush2.msra.mxu0 0.0
        %942 = vmatprep.subr.mxu0 0.0
        %943 = vmatpush2.msra.mxu0 0.0
        %944 = vmatprep.subr.mxu0 0.0
        %945 = vmatpush2.msra.mxu0 0.0
        %946 = vmatprep.subr.mxu0 0.0
        %947 = vmatpush2.msra.mxu0 0.0
        %948 = vmatprep.subr.mxu0 0.0
        %949 = vmatpush2.msra.mxu0 0.0
        %950 = vmatprep.subr.mxu0 0.0
        %951 = vmatpush2.msra.mxu0 0.0
        %952 = vmatprep.mubr.f32.mxu0 0.0
        %953 = vmatmul.mubr.f32.gmra.mxu0 %v886
        %v954 = vpop.f32.mrf.mxu0
        %v955 = vadd.f32 0.0, %v954
        %v956 = vpop.f32.mrf.mxu0
        %957 = vdwg.mxu0
        %v958 = vrcp.pop %v876
        %v959 = vmul.f32 %v955, %v958
        %960 = vrot.lane.b32.xlu0 %v620, 112
        %v961 = vpop.permute.xlu0 %960
        %962 = vrot.lane.b32.xlu0 %v513, 112
        %v963 = vpop.permute.xlu0 %962
        %964 = vrot.lane.b32.xlu0 %v518, 112
        %v965 = vpop.permute.xlu0 %964
        %v966 = vsel %vm621, %v961, 0
        %v968 = vsel %vm621, %v963, 0
        %v970 = vsel %vm621, %v965, 0
        %972 = vmatprep.subr.mxu0 0.0
        %973 = vmatpush1.xpose.msra.mxu0 0.0
        %974 = vmatprep.subr.mxu0 0.0
        %975 = vmatpush1.xpose.msra.mxu0 0.0
        %976 = vmatprep.subr.mxu0 0.0
        %977 = vmatpush1.xpose.msra.mxu0 0.0
        %978 = vmatprep.subr.mxu0 0.0
        %979 = vmatpush1.xpose.msra.mxu0 0.0
        %980 = vmatprep.subr.mxu0 0.0
        %981 = vmatpush1.xpose.msra.mxu0 0.0
        %982 = vmatprep.subr.mxu0 0.0
        %983 = vmatpush1.xpose.msra.mxu0 0.0
        %984 = vmatprep.subr.mxu0 0.0
        %985 = vmatpush1.xpose.msra.mxu0 0.0
        %986 = vmatprep.subr.mxu0 0.0
        %987 = vmatpush1.xpose.msra.mxu0 0.0
        %988 = vmatprep.subr.mxu0 0.0
        %989 = vmatpush1.xpose.msra.mxu0 0.0
        %990 = vmatprep.subr.mxu0 0.0
        %991 = vmatpush1.xpose.msra.mxu0 0.0
        %992 = vmatprep.subr.mxu0 0.0
        %993 = vmatpush1.xpose.msra.mxu0 0.0
        %994 = vmatprep.subr.mxu0 0.0
        %995 = vmatpush1.xpose.msra.mxu0 0.0
        %996 = vmatprep.subr.mxu0 0.0
        %997 = vmatpush1.xpose.msra.mxu0 0.0
        %998 = vmatprep.subr.mxu0 0.0
        %999 = vmatpush1.xpose.msra.mxu0 0.0
        %1000 = vmatprep.subr.mxu0 0.0
        %1001 = vmatpush1.xpose.msra.mxu0 %v970
        %1002 = vmatprep.subr.mxu0 0.0
        %1003 = vmatpush1.xpose.msra.mxu0 %v968
        %1004 = vmatprep.subr.mxu0 0.0
        %1005 = vmatpush2.xpose.msra.mxu0 0.0
        %1006 = vmatprep.subr.mxu0 0.0
        %1007 = vmatpush2.xpose.msra.mxu0 0.0
        %1008 = vmatprep.subr.mxu0 0.0
        %1009 = vmatpush2.xpose.msra.mxu0 0.0
        %1010 = vmatprep.subr.mxu0 0.0
        %1011 = vmatpush2.xpose.msra.mxu0 0.0
        %1012 = vmatprep.subr.mxu0 0.0
        %1013 = vmatpush2.xpose.msra.mxu0 0.0
        %1014 = vmatprep.subr.mxu0 0.0
        %1015 = vmatpush2.xpose.msra.mxu0 0.0
        %1016 = vmatprep.subr.mxu0 0.0
        %1017 = vmatpush2.xpose.msra.mxu0 0.0
        %1018 = vmatprep.subr.mxu0 0.0
        %1019 = vmatpush2.xpose.msra.mxu0 0.0
        %1020 = vmatprep.subr.mxu0 0.0
        %1021 = vmatpush2.xpose.msra.mxu0 0.0
        %1022 = vmatprep.subr.mxu0 0.0
        %1023 = vmatpush2.xpose.msra.mxu0 0.0
        %1024 = vmatprep.subr.mxu0 0.0
        %1025 = vmatpush2.xpose.msra.mxu0 0.0
        %1026 = vmatprep.subr.mxu0 0.0
        %1027 = vmatpush2.xpose.msra.mxu0 0.0
        %1028 = vmatprep.subr.mxu0 0.0
        %1029 = vmatpush2.xpose.msra.mxu0 0.0
        %1030 = vmatprep.subr.mxu0 0.0
        %1031 = vmatpush2.xpose.msra.mxu0 0.0
        %1032 = vmatprep.subr.mxu0 0.0
        %1033 = vmatpush2.xpose.msra.mxu0 0.0
        %1034 = vmatprep.subr.mxu0 0.0
        %1035 = vmatpush2.xpose.msra.mxu0 0.0
        %1036 = vmatprep.mubr.f32.mxu0 0.0
        %1037 = vmatmul.mubr.f32.gmra.mxu0 %v966
        %v1038 = vpop.f32.mrf.mxu0
        %v1039 = vadd.f32 0.0, %v1038
        %v1040 = vpop.f32.mrf.mxu0
        %1041 = vdwg.mxu0
        %v1042 = vsel %vm701, %v1039, -inf
        %1043 = vmax.xlane.f32.xlu0 %v1042
        %v1044 = vpop.xlane.xlu0 %1043
        %v1045 = vsub.f32 %v1039, %v1044
        %v1046 = vmul.f32 %v1045, 1.442695
        %v1047 = vpow.pop %v1046
        %v1048 = vsel %vm701, %v1047, 0.0
        %1049 = vadd.xlane.f32.xlu0 %v1048
        %v1050 = vpop.xlane.xlu0 %1049
        %1051 = vrot.lane.b32.xlu0 %v612, 112
        %v1052 = vpop.permute.xlu0 %1051
        %1053 = vrot.lane.b32.xlu0 %v617, 112
        %v1054 = vpop.permute.xlu0 %1053
        %v1058 = vsel %vm701, %v1047, 0
        %1060 = vmatprep.subr.mxu0 0.0
        %1061 = vmatpush1.msra.mxu0 0.0
        %1062 = vmatprep.subr.mxu0 0.0
        %1063 = vmatpush1.msra.mxu0 0.0
        %1064 = vmatprep.subr.mxu0 0.0
        %1065 = vmatpush1.msra.mxu0 0.0
        %1066 = vmatprep.subr.mxu0 0.0
        %1067 = vmatpush1.msra.mxu0 0.0
        %1068 = vmatprep.subr.mxu0 0.0
        %1069 = vmatpush1.msra.mxu0 0.0
        %1070 = vmatprep.subr.mxu0 0.0
        %1071 = vmatpush1.msra.mxu0 0.0
        %1072 = vmatprep.subr.mxu0 0.0
        %1073 = vmatpush1.msra.mxu0 0.0
        %1074 = vmatprep.subr.mxu0 0.0
        %1075 = vmatpush1.msra.mxu0 0.0
        %1076 = vmatprep.subr.mxu0 0.0
        %1077 = vmatpush1.msra.mxu0 0.0
        %1078 = vmatprep.subr.mxu0 0.0
        %1079 = vmatpush1.msra.mxu0 0.0
        %1080 = vmatprep.subr.mxu0 0.0
        %1081 = vmatpush1.msra.mxu0 0.0
        %1082 = vmatprep.subr.mxu0 0.0
        %1083 = vmatpush1.msra.mxu0 0.0
        %1084 = vmatprep.subr.mxu0 0.0
        %1085 = vmatpush1.msra.mxu0 0.0
        %1086 = vmatprep.subr.mxu0 0.0
        %1087 = vmatpush1.msra.mxu0 0.0
        %1088 = vmatprep.subr.mxu0 0.0
        %1089 = vmatpush1.msra.mxu0 %v1054
        %1090 = vmatprep.subr.mxu0 0.0
        %1091 = vmatpush1.msra.mxu0 %v1052
        %1092 = vmatprep.subr.mxu0 0.0
        %1093 = vmatpush2.msra.mxu0 0.0
        %1094 = vmatprep.subr.mxu0 0.0
        %1095 = vmatpush2.msra.mxu0 0.0
        %1096 = vmatprep.subr.mxu0 0.0
        %1097 = vmatpush2.msra.mxu0 0.0
        %1098 = vmatprep.subr.mxu0 0.0
        %1099 = vmatpush2.msra.mxu0 0.0
        %1100 = vmatprep.subr.mxu0 0.0
        %1101 = vmatpush2.msra.mxu0 0.0
        %1102 = vmatprep.subr.mxu0 0.0
        %1103 = vmatpush2.msra.mxu0 0.0
        %1104 = vmatprep.subr.mxu0 0.0
        %1105 = vmatpush2.msra.mxu0 0.0
        %1106 = vmatprep.subr.mxu0 0.0
        %1107 = vmatpush2.msra.mxu0 0.0
        %1108 = vmatprep.subr.mxu0 0.0
        %1109 = vmatpush2.msra.mxu0 0.0
        %1110 = vmatprep.subr.mxu0 0.0
        %1111 = vmatpush2.msra.mxu0 0.0
        %1112 = vmatprep.subr.mxu0 0.0
        %1113 = vmatpush2.msra.mxu0 0.0
        %1114 = vmatprep.subr.mxu0 0.0
        %1115 = vmatpush2.msra.mxu0 0.0
        %1116 = vmatprep.subr.mxu0 0.0
        %1117 = vmatpush2.msra.mxu0 0.0
        %1118 = vmatprep.subr.mxu0 0.0
        %1119 = vmatpush2.msra.mxu0 0.0
        %1120 = vmatprep.subr.mxu0 0.0
        %1121 = vmatpush2.msra.mxu0 0.0
        %1122 = vmatprep.subr.mxu0 0.0
        %1123 = vmatpush2.msra.mxu0 0.0
        %1124 = vmatprep.mubr.f32.mxu0 0.0
        %1125 = vmatmul.mubr.f32.gmra.mxu0 %v1058
        %v1126 = vpop.f32.mrf.mxu0
        %v1127 = vadd.f32 0.0, %v1126
        %v1128 = vpop.f32.mrf.mxu0
        %1129 = vdwg.mxu0
        %v1130 = vrcp.pop %v1050
        %v1131 = vmul.f32 %v1127, %v1130
        %1132 = vrot.lane.b32.xlu0 %v620, 104
        %v1133 = vpop.permute.xlu0 %1132
        %1134 = vrot.lane.b32.xlu0 %v513, 104
        %v1135 = vpop.permute.xlu0 %1134
        %1136 = vrot.lane.b32.xlu0 %v518, 104
        %v1137 = vpop.permute.xlu0 %1136
        %v1138 = vsel %vm621, %v1133, 0
        %v1140 = vsel %vm621, %v1135, 0
        %v1142 = vsel %vm621, %v1137, 0
        %1144 = vmatprep.subr.mxu0 0.0
        %1145 = vmatpush1.xpose.msra.mxu0 0.0
        %1146 = vmatprep.subr.mxu0 0.0
        %1147 = vmatpush1.xpose.msra.mxu0 0.0
        %1148 = vmatprep.subr.mxu0 0.0
        %1149 = vmatpush1.xpose.msra.mxu0 0.0
        %1150 = vmatprep.subr.mxu0 0.0
        %1151 = vmatpush1.xpose.msra.mxu0 0.0
        %1152 = vmatprep.subr.mxu0 0.0
        %1153 = vmatpush1.xpose.msra.mxu0 0.0
        %1154 = vmatprep.subr.mxu0 0.0
        %1155 = vmatpush1.xpose.msra.mxu0 0.0
        %1156 = vmatprep.subr.mxu0 0.0
        %1157 = vmatpush1.xpose.msra.mxu0 0.0
        %1158 = vmatprep.subr.mxu0 0.0
        %1159 = vmatpush1.xpose.msra.mxu0 0.0
        %1160 = vmatprep.subr.mxu0 0.0
        %1161 = vmatpush1.xpose.msra.mxu0 0.0
        %1162 = vmatprep.subr.mxu0 0.0
        %1163 = vmatpush1.xpose.msra.mxu0 0.0
        %1164 = vmatprep.subr.mxu0 0.0
        %1165 = vmatpush1.xpose.msra.mxu0 0.0
        %1166 = vmatprep.subr.mxu0 0.0
        %1167 = vmatpush1.xpose.msra.mxu0 0.0
        %1168 = vmatprep.subr.mxu0 0.0
        %1169 = vmatpush1.xpose.msra.mxu0 0.0
        %1170 = vmatprep.subr.mxu0 0.0
        %1171 = vmatpush1.xpose.msra.mxu0 0.0
        %1172 = vmatprep.subr.mxu0 0.0
        %1173 = vmatpush1.xpose.msra.mxu0 %v1142
        %1174 = vmatprep.subr.mxu0 0.0
        %1175 = vmatpush1.xpose.msra.mxu0 %v1140
        %1176 = vmatprep.subr.mxu0 0.0
        %1177 = vmatpush2.xpose.msra.mxu0 0.0
        %1178 = vmatprep.subr.mxu0 0.0
        %1179 = vmatpush2.xpose.msra.mxu0 0.0
        %1180 = vmatprep.subr.mxu0 0.0
        %1181 = vmatpush2.xpose.msra.mxu0 0.0
        %1182 = vmatprep.subr.mxu0 0.0
        %1183 = vmatpush2.xpose.msra.mxu0 0.0
        %1184 = vmatprep.subr.mxu0 0.0
        %1185 = vmatpush2.xpose.msra.mxu0 0.0
        %1186 = vmatprep.subr.mxu0 0.0
        %1187 = vmatpush2.xpose.msra.mxu0 0.0
        %1188 = vmatprep.subr.mxu0 0.0
        %1189 = vmatpush2.xpose.msra.mxu0 0.0
        %1190 = vmatprep.subr.mxu0 0.0
        %1191 = vmatpush2.xpose.msra.mxu0 0.0
        %1192 = vmatprep.subr.mxu0 0.0
        %1193 = vmatpush2.xpose.msra.mxu0 0.0
        %1194 = vmatprep.subr.mxu0 0.0
        %1195 = vmatpush2.xpose.msra.mxu0 0.0
        %1196 = vmatprep.subr.mxu0 0.0
        %1197 = vmatpush2.xpose.msra.mxu0 0.0
        %1198 = vmatprep.subr.mxu0 0.0
        %1199 = vmatpush2.xpose.msra.mxu0 0.0
        %1200 = vmatprep.subr.mxu0 0.0
        %1201 = vmatpush2.xpose.msra.mxu0 0.0
        %1202 = vmatprep.subr.mxu0 0.0
        %1203 = vmatpush2.xpose.msra.mxu0 0.0
        %1204 = vmatprep.subr.mxu0 0.0
        %1205 = vmatpush2.xpose.msra.mxu0 0.0
        %1206 = vmatprep.subr.mxu0 0.0
        %1207 = vmatpush2.xpose.msra.mxu0 0.0
        %1208 = vmatprep.mubr.f32.mxu0 0.0
        %1209 = vmatmul.mubr.f32.gmra.mxu0 %v1138
        %v1210 = vpop.f32.mrf.mxu0
        %v1211 = vadd.f32 0.0, %v1210
        %v1212 = vpop.f32.mrf.mxu0
        %1213 = vdwg.mxu0
        %v1214 = vsel %vm701, %v1211, -inf
        %1215 = vmax.xlane.f32.xlu0 %v1214
        %v1216 = vpop.xlane.xlu0 %1215
        %v1217 = vsub.f32 %v1211, %v1216
        %v1218 = vmul.f32 %v1217, 1.442695
        %v1219 = vpow.pop %v1218
        %v1220 = vsel %vm701, %v1219, 0.0
        %1221 = vadd.xlane.f32.xlu0 %v1220
        %v1222 = vpop.xlane.xlu0 %1221
        %1223 = vrot.lane.b32.xlu0 %v612, 104
        %v1224 = vpop.permute.xlu0 %1223
        %1225 = vrot.lane.b32.xlu0 %v617, 104
        %v1226 = vpop.permute.xlu0 %1225
        %v1230 = vsel %vm701, %v1219, 0
        %1232 = vmatprep.subr.mxu0 0.0
        %1233 = vmatpush1.msra.mxu0 0.0
        %1234 = vmatprep.subr.mxu0 0.0
        %1235 = vmatpush1.msra.mxu0 0.0
        %1236 = vmatprep.subr.mxu0 0.0
        %1237 = vmatpush1.msra.mxu0 0.0
        %1238 = vmatprep.subr.mxu0 0.0
        %1239 = vmatpush1.msra.mxu0 0.0
        %1240 = vmatprep.subr.mxu0 0.0
        %1241 = vmatpush1.msra.mxu0 0.0
        %1242 = vmatprep.subr.mxu0 0.0
        %1243 = vmatpush1.msra.mxu0 0.0
        %1244 = vmatprep.subr.mxu0 0.0
        %1245 = vmatpush1.msra.mxu0 0.0
        %1246 = vmatprep.subr.mxu0 0.0
        %1247 = vmatpush1.msra.mxu0 0.0
        %1248 = vmatprep.subr.mxu0 0.0
        %1249 = vmatpush1.msra.mxu0 0.0
        %1250 = vmatprep.subr.mxu0 0.0
        %1251 = vmatpush1.msra.mxu0 0.0
        %1252 = vmatprep.subr.mxu0 0.0
        %1253 = vmatpush1.msra.mxu0 0.0
        %1254 = vmatprep.subr.mxu0 0.0
        %1255 = vmatpush1.msra.mxu0 0.0
        %1256 = vmatprep.subr.mxu0 0.0
        %1257 = vmatpush1.msra.mxu0 0.0
        %1258 = vmatprep.subr.mxu0 0.0
        %1259 = vmatpush1.msra.mxu0 0.0
        %1260 = vmatprep.subr.mxu0 0.0
        %1261 = vmatpush1.msra.mxu0 %v1226
        %1262 = vmatprep.subr.mxu0 0.0
        %1263 = vmatpush1.msra.mxu0 %v1224
        %1264 = vmatprep.subr.mxu0 0.0
        %1265 = vmatpush2.msra.mxu0 0.0
        %1266 = vmatprep.subr.mxu0 0.0
        %1267 = vmatpush2.msra.mxu0 0.0
        %1268 = vmatprep.subr.mxu0 0.0
        %1269 = vmatpush2.msra.mxu0 0.0
        %1270 = vmatprep.subr.mxu0 0.0
        %1271 = vmatpush2.msra.mxu0 0.0
        %1272 = vmatprep.subr.mxu0 0.0
        %1273 = vmatpush2.msra.mxu0 0.0
        %1274 = vmatprep.subr.mxu0 0.0
        %1275 = vmatpush2.msra.mxu0 0.0
        %1276 = vmatprep.subr.mxu0 0.0
        %1277 = vmatpush2.msra.mxu0 0.0
        %1278 = vmatprep.subr.mxu0 0.0
        %1279 = vmatpush2.msra.mxu0 0.0
        %1280 = vmatprep.subr.mxu0 0.0
        %1281 = vmatpush2.msra.mxu0 0.0
        %1282 = vmatprep.subr.mxu0 0.0
        %1283 = vmatpush2.msra.mxu0 0.0
        %1284 = vmatprep.subr.mxu0 0.0
        %1285 = vmatpush2.msra.mxu0 0.0
        %1286 = vmatprep.subr.mxu0 0.0
        %1287 = vmatpush2.msra.mxu0 0.0
        %1288 = vmatprep.subr.mxu0 0.0
        %1289 = vmatpush2.msra.mxu0 0.0
        %1290 = vmatprep.subr.mxu0 0.0
        %1291 = vmatpush2.msra.mxu0 0.0
        %1292 = vmatprep.subr.mxu0 0.0
        %1293 = vmatpush2.msra.mxu0 0.0
        %1294 = vmatprep.subr.mxu0 0.0
        %1295 = vmatpush2.msra.mxu0 0.0
        %1296 = vmatprep.mubr.f32.mxu0 0.0
        %1297 = vmatmul.mubr.f32.gmra.mxu0 %v1230
        %v1298 = vpop.f32.mrf.mxu0
        %v1299 = vadd.f32 0.0, %v1298
        %v1300 = vpop.f32.mrf.mxu0
        %1301 = vdwg.mxu0
        %v1302 = vrcp.pop %v1222
        %v1303 = vmul.f32 %v1299, %v1302
        %1305 = vrot.lane.b32.xlu0 %v959, 8
        %v1306 = vpop.permute.xlu0 %1305
        %1309 = vrot.lane.b32.xlu0 %v1131, 16
        %v1310 = vpop.permute.xlu0 %1309
        %1313 = vrot.lane.b32.xlu0 %v1303, 24
        %v1314 = vpop.permute.xlu0 %1313
        %v1316 = vsel %vm621, %v785, %v1306
        %v1317 = vsel %vm701, %v1316, %v1310
        %vm1318 = vcmask 195584
        %v1319 = vsel %vm1318, %v1317, %v1314
        %v1320 = vld [vmem:[%s5] sm:$0xff]
        %v1321 = vld [vmem:[%s5 + $0x8] sm:$0xff]
        %v1322 = vld [vmem:[%s5 + $0x10] sm:$0xff]
        %v1323 = vld [vmem:[%s5 + $0x18] sm:$0xff]
        %v1324 = vld [vmem:[%s6] sm:$0x1]
        %v1326 = vlaneseq
        %v1327 = vshrl.u32 %v1326, 7
        %v1328 = vsub.s32 0, %v1327
        %v1329 = vrot.slane %v1324, %v1328
        %v1332 = vsel %vm336, %v1319, 0
        %v1335 = vsel %vm336, %v1320, 0
        %v1338 = vsel %vm336, %v1321, 0
        %v1341 = vsel %vm336, %v1322, 0
        %v1344 = vsel %vm336, %v1323, 0
        %1346 = vmatprep.subr.mxu0 0.0
        %1347 = vmatpush1.xpose.msra.mxu0 0.0
        %1348 = vmatprep.subr.mxu0 0.0
        %1349 = vmatpush1.xpose.msra.mxu0 0.0
        %1350 = vmatprep.subr.mxu0 0.0
        %1351 = vmatpush1.xpose.msra.mxu0 0.0
        %1352 = vmatprep.subr.mxu0 0.0
        %1353 = vmatpush1.xpose.msra.mxu0 0.0
        %1354 = vmatprep.subr.mxu0 0.0
        %1355 = vmatpush1.xpose.msra.mxu0 0.0
        %1356 = vmatprep.subr.mxu0 0.0
        %1357 = vmatpush1.xpose.msra.mxu0 0.0
        %1358 = vmatprep.subr.mxu0 0.0
        %1359 = vmatpush1.xpose.msra.mxu0 0.0
        %1360 = vmatprep.subr.mxu0 0.0
        %1361 = vmatpush1.xpose.msra.mxu0 0.0
        %1362 = vmatprep.subr.mxu0 0.0
        %1363 = vmatpush1.xpose.msra.mxu0 0.0
        %1364 = vmatprep.subr.mxu0 0.0
        %1365 = vmatpush1.xpose.msra.mxu0 0.0
        %1366 = vmatprep.subr.mxu0 0.0
        %1367 = vmatpush1.xpose.msra.mxu0 0.0
        %1368 = vmatprep.subr.mxu0 0.0
        %1369 = vmatpush1.xpose.msra.mxu0 0.0
        %1370 = vmatprep.subr.mxu0 0.0
        %1371 = vmatpush1.xpose.msra.mxu0 %v1344
        %1372 = vmatprep.subr.mxu0 0.0
        %1373 = vmatpush1.xpose.msra.mxu0 %v1341
        %1374 = vmatprep.subr.mxu0 0.0
        %1375 = vmatpush1.xpose.msra.mxu0 %v1338
        %1376 = vmatprep.subr.mxu0 0.0
        %1377 = vmatpush1.xpose.msra.mxu0 %v1335
        %1378 = vmatprep.subr.mxu0 0.0
        %1379 = vmatpush2.xpose.msra.mxu0 0.0
        %1380 = vmatprep.subr.mxu0 0.0
        %1381 = vmatpush2.xpose.msra.mxu0 0.0
        %1382 = vmatprep.subr.mxu0 0.0
        %1383 = vmatpush2.xpose.msra.mxu0 0.0
        %1384 = vmatprep.subr.mxu0 0.0
        %1385 = vmatpush2.xpose.msra.mxu0 0.0
        %1386 = vmatprep.subr.mxu0 0.0
        %1387 = vmatpush2.xpose.msra.mxu0 0.0
        %1388 = vmatprep.subr.mxu0 0.0
        %1389 = vmatpush2.xpose.msra.mxu0 0.0
        %1390 = vmatprep.subr.mxu0 0.0
        %1391 = vmatpush2.xpose.msra.mxu0 0.0
        %1392 = vmatprep.subr.mxu0 0.0
        %1393 = vmatpush2.xpose.msra.mxu0 0.0
        %1394 = vmatprep.subr.mxu0 0.0
        %1395 = vmatpush2.xpose.msra.mxu0 0.0
        %1396 = vmatprep.subr.mxu0 0.0
        %1397 = vmatpush2.xpose.msra.mxu0 0.0
        %1398 = vmatprep.subr.mxu0 0.0
        %1399 = vmatpush2.xpose.msra.mxu0 0.0
        %1400 = vmatprep.subr.mxu0 0.0
        %1401 = vmatpush2.xpose.msra.mxu0 0.0
        %1402 = vmatprep.subr.mxu0 0.0
        %1403 = vmatpush2.xpose.msra.mxu0 0.0
        %1404 = vmatprep.subr.mxu0 0.0
        %1405 = vmatpush2.xpose.msra.mxu0 0.0
        %1406 = vmatprep.subr.mxu0 0.0
        %1407 = vmatpush2.xpose.msra.mxu0 0.0
        %1408 = vmatprep.subr.mxu0 0.0
        %1409 = vmatpush2.xpose.msra.mxu0 0.0
        %1410 = vmatprep.mubr.f32.mxu0 0.0
        %1411 = vmatmul.mubr.f32.gmra.mxu0 %v1332
        %v1412 = vpop.f32.mrf.mxu0
        %v1413 = vadd.f32 %v1329, %v1412
        %v1414 = vpop.f32.mrf.mxu0
        %1415 = vdwg.mxu0
        %1416 = vst.msk [vmem:[%s301] sm:$0xff] %vm336, %v1413
        %s1417 = sand.u32 %s191, 1
        %s1418 = scalar_lea.sflag [#allocation3], %s1417
        %s1419 = sand.u32 %s191, 1
        %s1420 = smul.addr %s1419, 8
        %s1421 = scalar_lea.vmem [#allocation2], %s1420
        // Predicated region
        $region49: #{cross_attention_forward.1} parent=47 // pred_check
          %p1422 = pneg %p201
        $region50: #{cross_attention_forward.1} parent=47 // pred_check_branch
          %1424 = sbr.rel (%p1422) target = $region52
        $region51: #{cross_attention_forward.1} parent=47 // pred_region
          %s1426 = ssub.s32 128, 128
          %1427 = vsyncadd %s1418, %s1426
          %s1428 = smul.addr %s21, 128
          %s1429 = scalar_lea.hbm %s7, %s1428
          %s1431 = sshll.u32 %s1421, 4
          %s1432 = int_to_ptr.vmem [resolvable:$true] %s1431
          %1434 = dma.vmem_to_hbm [thread:$0]  %s1432, 128, %s1429, %s1418
        $region52: #{cross_attention_forward.1} parent=47 // pred_fallthru
          _
      $region48: #{cross_attention_forward.1} parent=5 // pred_fallthru
        _
      %p1435 = scmp.le.s32.totalorder 2, %s16
      // Predicated region
      $region53: #{cross_attention_forward.1} parent=5 // pred_check
        %p1436 = pneg %p1435
      $region54: #{cross_attention_forward.1} parent=5 // pred_check_branch
        %1438 = sbr.rel (%p1436) target = $region56
      $region55: #{cross_attention_forward.1} parent=5 // pred_region
        %s1439 = ssub.s32 %s16, 2
        // Predicated region
        $region57: #{cross_attention_forward.1} parent=55 // pred_check
          %p1440 = pneg %p207
        $region58: #{cross_attention_forward.1} parent=55 // pred_check_branch
          %1442 = sbr.rel (%p1440) target = $region60
        $region59: #{cross_attention_forward.1} parent=55 // pred_region
          %s1443 = sand.u32 %s192, 1
          %s1444 = scalar_lea.sflag [#allocation3], %s1443
          %s1445 = sand.u32 %s192, 1
          %s1446 = smul.addr %s1445, 8
          %s1447 = scalar_lea.vmem [#allocation2], %s1446
          %1448 = dma.done %s1444, 128
        $region60: #{cross_attention_forward.1} parent=55 // pred_fallthru
          _
      $region56: #{cross_attention_forward.1} parent=5 // pred_fallthru
        _
    $region6: #{cross_attention_forward.1} parent=1 // loop_footer
      %s20 = sadd.s32 1, %s16
    $region7: #{cross_attention_forward.1} parent=1 // loop_footer_branch
      %15 = sbr.rel target = $region3
    $region8: #{cross_attention_forward.1} parent=1 // loop_exit
      _
    %1449 = vsyncpa [#allocation3], 1
    %s1450 = scalar_lea.sflag [#allocation3], 1
    %1451 = vsyncpa %s1450, 1

</llo_original>
